<compile_context>
chip_gen: v5e
topology: v5e:2x2
jax: 0.10.0
libtpu: 0.0.40
codegen_flags: <defaults>
</compile_context>

<pallas_src>
import math
import functools

import jax
import jax.numpy as jnp
from jax import lax
from jax.experimental import pallas as pl
from jax.experimental.pallas import tpu as pltpu


def _layer_norm(y, g, b, eps=1e-5):
    mu = jnp.mean(y, axis=-1, keepdims=True)
    var = jnp.mean((y - mu) ** 2, axis=-1, keepdims=True)
    return (y - mu) * lax.rsqrt(var + eps) * g + b


def transam_kernel(x_ref, pe_ref,
                   wqkv_ref, bqkv_ref, wo_ref, bo_ref,
                   g1_ref, be1_ref, w1_ref, b1_ref, w2_ref, b2_ref,
                   g2_ref, be2_ref, wd_ref, bd_ref,
                   out_ref, *, heads):
    Bb, S, D = x_ref.shape
    hd = D // heads
    scale = 1.0 / math.sqrt(hd)
    M = Bb * S

    # ---- positional encoding; fold batch into the matmul M dimension ----
    x = x_ref[...].astype(jnp.float32) + pe_ref[...][None, :, :]   # (Bb, S, D)
    xf = x.reshape(M, D)                                           # (M, D) f32
    xb = xf.astype(jnp.bfloat16)

    # ---- fused QKV projection: one (M, D) @ (D, 3D) matmul ----
    qkv = jnp.dot(xb, wqkv_ref[...], preferred_element_type=jnp.float32)
    qkv = qkv + bqkv_ref[...]
    q = (qkv[:, :D] * scale).astype(jnp.bfloat16)                  # pre-scaled
    k = qkv[:, D:2 * D].astype(jnp.bfloat16)
    v = qkv[:, 2 * D:].astype(jnp.bfloat16)

    # ---- causal mask generated in-kernel (no (S, S) HBM->VMEM DMA) ----
    row = lax.broadcasted_iota(jnp.int32, (S, S), 0)
    col = lax.broadcasted_iota(jnp.int32, (S, S), 1)
    causal = (col <= row)[None, :, :]                              # (1, S, S)

    # ---- multi-head attention; head concat folded into output proj ----
    wo = wo_ref[...]                                               # (D, D) bf16
    attn = jnp.zeros((M, D), jnp.float32)
    for h in range(heads):                                         # static unroll
        lo = h * hd
        qh = q[:, lo:lo + hd].reshape(Bb, S, hd)
        kh = k[:, lo:lo + hd].reshape(Bb, S, hd)
        vh = v[:, lo:lo + hd].reshape(Bb, S, hd)
        s = jnp.einsum('bqe,bke->bqk', qh, kh,
                       preferred_element_type=jnp.float32)         # (Bb, S, S)
        s = jnp.where(causal, s, -jnp.inf)
        m = jnp.max(s, axis=-1, keepdims=True)
        p = jnp.exp(s - m)
        p = p * pl.reciprocal(jnp.sum(p, axis=-1, keepdims=True), approx=True)
        ctx = jnp.einsum('bqk,bke->bqe', p.astype(jnp.bfloat16), vh,
                         preferred_element_type=jnp.float32)       # (Bb, S, hd)
        attn = attn + jnp.dot(ctx.reshape(M, hd).astype(jnp.bfloat16),
                              wo[lo:lo + hd, :],
                              preferred_element_type=jnp.float32)
    attn = attn + bo_ref[...]

    # ---- residual + layernorm 1 (post-norm) ----
    y = _layer_norm(xf + attn, g1_ref[...], be1_ref[...])

    # ---- feed-forward (ReLU) ----
    ff = jnp.dot(y.astype(jnp.bfloat16), w1_ref[...],
                 preferred_element_type=jnp.float32) + b1_ref[...]
    ff = jnp.maximum(ff, 0.0)
    ff = jnp.dot(ff.astype(jnp.bfloat16), w2_ref[...],
                 preferred_element_type=jnp.float32) + b2_ref[...]

    # ---- residual + layernorm 2 ----
    z = _layer_norm(y + ff, g2_ref[...], be2_ref[...])

    # ---- decoder Linear(D -> 1): VPU multiply + lane reduce (no N=1 matmul) ----
    dec = jnp.sum(z * wd_ref[...], axis=-1, keepdims=True) + bd_ref[...]  # (M, 1)
    out_ref[...] = dec.reshape(Bb, S).astype(out_ref.dtype)               # lane-dense


def make_positional_encoding(max_len, d_model):
    position = jnp.arange(max_len, dtype=jnp.float32)[:, None]
    div_term = jnp.exp(jnp.arange(0, d_model, 2, dtype=jnp.float32)
                       * (-math.log(10000.0) / d_model))
    pe = jnp.zeros((max_len, d_model), jnp.float32)
    pe = pe.at[:, 0::2].set(jnp.sin(position * div_term))
    pe = pe.at[:, 1::2].set(jnp.cos(position * div_term))
    return pe


def init_params(key, d_model, heads, dim_ff):
    ks = jax.random.split(key, 8)
    std = 0.05
    p = {}
    p['wq'] = jax.random.normal(ks[0], (d_model, d_model), jnp.float32) * std
    p['wk'] = jax.random.normal(ks[1], (d_model, d_model), jnp.float32) * std
    p['wv'] = jax.random.normal(ks[2], (d_model, d_model), jnp.float32) * std
    p['bq'] = jnp.zeros((1, d_model), jnp.float32)
    p['bk'] = jnp.zeros((1, d_model), jnp.float32)
    p['bv'] = jnp.zeros((1, d_model), jnp.float32)
    p['wo'] = jax.random.normal(ks[3], (d_model, d_model), jnp.float32) * std
    p['bo'] = jnp.zeros((1, d_model), jnp.float32)
    p['g1'] = jnp.ones((1, d_model), jnp.float32)
    p['be1'] = jnp.zeros((1, d_model), jnp.float32)
    p['w1'] = jax.random.normal(ks[4], (dim_ff, d_model), jnp.float32) * std
    p['b1'] = jnp.zeros((1, dim_ff), jnp.float32)
    p['w2'] = jax.random.normal(ks[5], (d_model, dim_ff), jnp.float32) * std
    p['b2'] = jnp.zeros((1, d_model), jnp.float32)
    p['g2'] = jnp.ones((1, d_model), jnp.float32)
    p['be2'] = jnp.zeros((1, d_model), jnp.float32)
    # decoder init mirrors TransAm.init_weights(): uniform(-0.1, 0.1), bias zero
    p['wd'] = jax.random.uniform(ks[6], (1, d_model), jnp.float32, -0.1, 0.1)
    p['bd'] = jnp.zeros((1, 1), jnp.float32)
    return p


def prepare_params(p):
    """Fuse QKV, pre-transpose all matmul weights (no in-kernel .T), and cast
    matmul operands to bf16 (accumulation stays f32 in the kernel)."""
    f = {}
    f['wqkv_t'] = jnp.concatenate([p['wq'], p['wk'], p['wv']],
                                  axis=0).T.astype(jnp.bfloat16)      # (D, 3D)
    f['bqkv'] = jnp.concatenate([p['bq'], p['bk'], p['bv']], axis=1)  # (1, 3D)
    f['wo_t'] = p['wo'].T.astype(jnp.bfloat16)                        # (D, D)
    f['bo'] = p['bo']
    f['g1'] = p['g1']
    f['be1'] = p['be1']
    f['w1_t'] = p['w1'].T.astype(jnp.bfloat16)                        # (D, F)
    f['b1'] = p['b1']
    f['w2_t'] = p['w2'].T.astype(jnp.bfloat16)                        # (F, D)
    f['b2'] = p['b2']
    f['g2'] = p['g2']
    f['be2'] = p['be2']
    f['wd'] = p['wd']                                                 # (1, D) f32
    f['bd'] = p['bd']                                                 # (1, 1) f32
    return f


def _choose_batch_block(B):
    # Prefer >=2 grid steps (keeps both v7x TensorCores busy) with a
    # sublane-aligned batch block for the lane-dense (B, S) output;
    # otherwise take the whole batch in a single step.
    for bb in (512, 256, 128, 64, 32, 16, 8):
        if B % bb == 0 and B // bb >= 2:
            return bb
    return B


def transam_forward(src, params, pe_full, *, heads):
    """src: (S, B, D) float32 -> (S, B, 1) float32 (PyTorch seq-first layout)."""
    S, B, D = src.shape
    x = jnp.transpose(src, (1, 0, 2))            # (B, S, D)
    pe = pe_full[:S]                             # (S, D)

    fp = prepare_params(params)
    order = ['wqkv_t', 'bqkv', 'wo_t', 'bo', 'g1', 'be1',
             'w1_t', 'b1', 'w2_t', 'b2', 'g2', 'be2', 'wd', 'bd']
    plist = [fp[n] for n in order]

    Bb = _choose_batch_block(B)
    grid = (B // Bb,)

    def full_spec(a):
        nd = a.ndim
        return pl.BlockSpec(a.shape, lambda i, _nd=nd: (0,) * _nd)

    in_specs = ([pl.BlockSpec((Bb, S, D), lambda i: (i, 0, 0)),  # x (batch block)
                 full_spec(pe)]
                + [full_spec(a) for a in plist])

    out = pl.pallas_call(
        functools.partial(transam_kernel, heads=heads),
        out_shape=jax.ShapeDtypeStruct((B, S), jnp.float32),     # lane-dense
        grid=grid,
        in_specs=in_specs,
        out_specs=pl.BlockSpec((Bb, S), lambda i: (i, 0)),
        compiler_params=pltpu.CompilerParams(
            dimension_semantics=("parallel",)),
    )(x, pe, *plist)

    return jnp.transpose(out, (1, 0))[:, :, None]                # (S, B, 1)


if __name__ == "__main__":
    # Small shapes consistent with the module: d_model divisible by heads.
    S, B, D = 8, 2, 32
    HEADS = 4
    DIM_FF = 64
    MAX_ENC_LEN = 64
    assert D % HEADS == 0

    key = jax.random.PRNGKey(0)
    k_src, k_params = jax.random.split(key)
    src = jax.random.normal(k_src, (S, B, D), jnp.float32)   # (seq, batch, feature)

    params = init_params(k_params, D, HEADS, DIM_FF)
    pe_full = make_positional_encoding(MAX_ENC_LEN, D)

    out = transam_forward(src, params, pe_full, heads=HEADS)
    out = jax.block_until_ready(out)
    assert out.shape == (S, B, 1), out.shape
    print("KERNEL_OK")
</pallas_src>

<mosaic_0001>
module attributes {stable_mosaic.version = 11 : i64} {
  func.func @transam_kernel(%arg0: i32, %arg1: memref<2x8x32xf32, #tpu.memory_space<vmem>>, %arg2: memref<8x32xf32, #tpu.memory_space<vmem>>, %arg3: memref<32x96xbf16, #tpu.memory_space<vmem>>, %arg4: memref<1x96xf32, #tpu.memory_space<vmem>>, %arg5: memref<32x32xbf16, #tpu.memory_space<vmem>>, %arg6: memref<1x32xf32, #tpu.memory_space<vmem>>, %arg7: memref<1x32xf32, #tpu.memory_space<vmem>>, %arg8: memref<1x32xf32, #tpu.memory_space<vmem>>, %arg9: memref<32x64xbf16, #tpu.memory_space<vmem>>, %arg10: memref<1x64xf32, #tpu.memory_space<vmem>>, %arg11: memref<64x32xbf16, #tpu.memory_space<vmem>>, %arg12: memref<1x32xf32, #tpu.memory_space<vmem>>, %arg13: memref<1x32xf32, #tpu.memory_space<vmem>>, %arg14: memref<1x32xf32, #tpu.memory_space<vmem>>, %arg15: memref<1x32xf32, #tpu.memory_space<vmem>>, %arg16: memref<1x1xf32, #tpu.memory_space<vmem>>, %arg17: memref<2x8xf32, #tpu.memory_space<vmem>>) attributes {dimension_semantics = [#tpu.dimension_semantics<parallel>], iteration_bounds = array<i64: 1>, scalar_prefetch = 0 : i64, scratch_operands = 0 : i64, tpu.core_type = #tpu.core_type<tc>, window_params = [{transform_indices = @transform_0, window_bounds = array<i64: 2, 8, 32>}, {pipeline_mode = #tpu.pipeline_mode<synchronous>, transform_indices = @transform_1, window_bounds = array<i64: 8, 32>}, {pipeline_mode = #tpu.pipeline_mode<synchronous>, transform_indices = @transform_2, window_bounds = array<i64: 32, 96>}, {pipeline_mode = #tpu.pipeline_mode<synchronous>, transform_indices = @transform_3, window_bounds = array<i64: 1, 96>}, {pipeline_mode = #tpu.pipeline_mode<synchronous>, transform_indices = @transform_4, window_bounds = array<i64: 32, 32>}, {pipeline_mode = #tpu.pipeline_mode<synchronous>, transform_indices = @transform_5, window_bounds = array<i64: 1, 32>}, {pipeline_mode = #tpu.pipeline_mode<synchronous>, transform_indices = @transform_6, window_bounds = array<i64: 1, 32>}, {pipeline_mode = #tpu.pipeline_mode<synchronous>, transform_indices = @transform_7, window_bounds = array<i64: 1, 32>}, {pipeline_mode = #tpu.pipeline_mode<synchronous>, transform_indices = @transform_8, window_bounds = array<i64: 32, 64>}, {pipeline_mode = #tpu.pipeline_mode<synchronous>, transform_indices = @transform_9, window_bounds = array<i64: 1, 64>}, {pipeline_mode = #tpu.pipeline_mode<synchronous>, transform_indices = @transform_10, window_bounds = array<i64: 64, 32>}, {pipeline_mode = #tpu.pipeline_mode<synchronous>, transform_indices = @transform_11, window_bounds = array<i64: 1, 32>}, {pipeline_mode = #tpu.pipeline_mode<synchronous>, transform_indices = @transform_12, window_bounds = array<i64: 1, 32>}, {pipeline_mode = #tpu.pipeline_mode<synchronous>, transform_indices = @transform_13, window_bounds = array<i64: 1, 32>}, {pipeline_mode = #tpu.pipeline_mode<synchronous>, transform_indices = @transform_14, window_bounds = array<i64: 1, 32>}, {pipeline_mode = #tpu.pipeline_mode<synchronous>, transform_indices = @transform_15, window_bounds = array<i64: 1, 1>}, {transform_indices = @transform_16, window_bounds = array<i64: 2, 8>}]} {
    %c0 = arith.constant 0 : index
    %c0_0 = arith.constant 0 : index
    %c0_1 = arith.constant 0 : index
    %0 = vector.load %arg1[%c0, %c0_0, %c0_1] : memref<2x8x32xf32, #tpu.memory_space<vmem>>, vector<2x8x32xf32>
    %c0_2 = arith.constant 0 : index
    %c0_3 = arith.constant 0 : index
    %1 = vector.load %arg2[%c0_2, %c0_3] : memref<8x32xf32, #tpu.memory_space<vmem>>, vector<8x32xf32>
    %2 = vector.shape_cast %1 : vector<8x32xf32> to vector<1x8x32xf32>
    %3 = vector.broadcast %2 : vector<1x8x32xf32> to vector<2x8x32xf32>
    %4 = arith.addf %0, %3 : vector<2x8x32xf32>
    %5 = vector.shape_cast %4 : vector<2x8x32xf32> to vector<16x32xf32>
    %6 = arith.truncf %5 : vector<16x32xf32> to vector<16x32xbf16>
    %c0_4 = arith.constant 0 : index
    %c0_5 = arith.constant 0 : index
    %7 = vector.load %arg3[%c0_4, %c0_5] : memref<32x96xbf16, #tpu.memory_space<vmem>>, vector<32x96xbf16>
    %cst = arith.constant dense<0.000000e+00> : vector<16x96xf32>
    %8 = tpu.matmul %6, %7, %cst {dimension_numbers = #tpu.dot_dimension_numbers<[1], [0], [0], [1], [0, 0, 1, 1], [], []>} : vector<16x32xbf16>, vector<32x96xbf16>, vector<16x96xf32> -> vector<16x96xf32>
    %c0_6 = arith.constant 0 : index
    %c0_7 = arith.constant 0 : index
    %9 = vector.load %arg4[%c0_6, %c0_7] : memref<1x96xf32, #tpu.memory_space<vmem>>, vector<1x96xf32>
    %10 = vector.broadcast %9 : vector<1x96xf32> to vector<16x96xf32>
    %11 = arith.addf %8, %10 : vector<16x96xf32>
    %12 = vector.extract_strided_slice %11 {offsets = [0, 0], sizes = [16, 32], strides = [1, 1]} : vector<16x96xf32> to vector<16x32xf32>
    %cst_8 = arith.constant 0.353553385 : f32
    %13 = vector.broadcast %cst_8 : f32 to vector<16x32xf32>
    %14 = arith.mulf %12, %13 : vector<16x32xf32>
    %15 = arith.truncf %14 : vector<16x32xf32> to vector<16x32xbf16>
    %16 = vector.extract_strided_slice %11 {offsets = [0, 32], sizes = [16, 32], strides = [1, 1]} : vector<16x96xf32> to vector<16x32xf32>
    %17 = arith.truncf %16 : vector<16x32xf32> to vector<16x32xbf16>
    %18 = vector.extract_strided_slice %11 {offsets = [0, 64], sizes = [16, 32], strides = [1, 1]} : vector<16x96xf32> to vector<16x32xf32>
    %19 = arith.truncf %18 : vector<16x32xf32> to vector<16x32xbf16>
    %20 = tpu.iota {dimensions = array<i32: 0>} : vector<8x8xi32>
    %21 = tpu.iota {dimensions = array<i32: 1>} : vector<8x8xi32>
    %22 = arith.cmpi sle, %21, %20 : vector<8x8xi32>
    %23 = vector.shape_cast %22 : vector<8x8xi1> to vector<1x8x8xi1>
    %c0_9 = arith.constant 0 : index
    %c0_10 = arith.constant 0 : index
    %24 = vector.load %arg5[%c0_9, %c0_10] : memref<32x32xbf16, #tpu.memory_space<vmem>>, vector<32x32xbf16>
    %cst_11 = arith.constant 0.000000e+00 : f32
    %25 = vector.broadcast %cst_11 : f32 to vector<16x32xf32>
    %26 = vector.extract_strided_slice %15 {offsets = [0, 0], sizes = [16, 8], strides = [1, 1]} : vector<16x32xbf16> to vector<16x8xbf16>
    %27 = vector.shape_cast %26 : vector<16x8xbf16> to vector<2x8x8xbf16>
    %28 = vector.extract_strided_slice %17 {offsets = [0, 0], sizes = [16, 8], strides = [1, 1]} : vector<16x32xbf16> to vector<16x8xbf16>
    %29 = vector.shape_cast %28 : vector<16x8xbf16> to vector<2x8x8xbf16>
    %30 = vector.extract_strided_slice %19 {offsets = [0, 0], sizes = [16, 8], strides = [1, 1]} : vector<16x32xbf16> to vector<16x8xbf16>
    %31 = vector.shape_cast %30 : vector<16x8xbf16> to vector<2x8x8xbf16>
    "tpu.trace_start"() <{level = 10 : i32, message = "bqe,bke->bqk"}> : () -> ()
    %cst_12 = arith.constant dense<0.000000e+00> : vector<2x8x8xf32>
    %32 = tpu.matmul %27, %29, %cst_12 {dimension_numbers = #tpu.dot_dimension_numbers<[2], [2], [1], [1], [0, 0, 0, 1, 1, 1], [0], [0]>} : vector<2x8x8xbf16>, vector<2x8x8xbf16>, vector<2x8x8xf32> -> vector<2x8x8xf32>
    %cst_13 = arith.constant 0xFF800000 : f32
    "tpu.trace_stop"() : () -> ()
    %33 = vector.shape_cast %23 : vector<1x8x8xi1> to vector<1x8x8xi1>
    %34 = vector.broadcast %33 : vector<1x8x8xi1> to vector<2x8x8xi1>
    %35 = vector.broadcast %cst_13 : f32 to vector<2x8x8xf32>
    %36 = arith.select %34, %32, %35 : vector<2x8x8xi1>, vector<2x8x8xf32>
    %cst_14 = arith.constant dense<0xFF800000> : vector<2x8xf32>
    %37 = vector.multi_reduction <maximumf>, %36, %cst_14 [2] : vector<2x8x8xf32> to vector<2x8xf32>
    %38 = vector.shape_cast %37 : vector<2x8xf32> to vector<2x8x1xf32>
    %39 = vector.broadcast %38 : vector<2x8x1xf32> to vector<2x8x8xf32>
    %40 = arith.subf %36, %39 : vector<2x8x8xf32>
    %41 = math.exp %40 : vector<2x8x8xf32>
    %cst_15 = arith.constant dense<0.000000e+00> : vector<2x8xf32>
    %42 = vector.multi_reduction <add>, %41, %cst_15 [2] : vector<2x8x8xf32> to vector<2x8xf32>
    %43 = vector.shape_cast %42 : vector<2x8xf32> to vector<2x8x1xf32>
    %44 = tpu.reciprocal %43 {approx = true} : vector<2x8x1xf32> -> vector<2x8x1xf32>
    %45 = vector.broadcast %44 : vector<2x8x1xf32> to vector<2x8x8xf32>
    %46 = arith.mulf %41, %45 : vector<2x8x8xf32>
    %47 = arith.truncf %46 : vector<2x8x8xf32> to vector<2x8x8xbf16>
    "tpu.trace_start"() <{level = 10 : i32, message = "bqk,bke->bqe"}> : () -> ()
    %cst_16 = arith.constant dense<0.000000e+00> : vector<2x8x8xf32>
    %48 = tpu.matmul %47, %31, %cst_16 {dimension_numbers = #tpu.dot_dimension_numbers<[2], [1], [1], [2], [0, 0, 0, 1, 1, 2], [0], [0]>} : vector<2x8x8xbf16>, vector<2x8x8xbf16>, vector<2x8x8xf32> -> vector<2x8x8xf32>
    "tpu.trace_stop"() : () -> ()
    %49 = vector.shape_cast %48 : vector<2x8x8xf32> to vector<16x8xf32>
    %50 = arith.truncf %49 : vector<16x8xf32> to vector<16x8xbf16>
    %51 = vector.extract_strided_slice %24 {offsets = [0, 0], sizes = [8, 32], strides = [1, 1]} : vector<32x32xbf16> to vector<8x32xbf16>
    %cst_17 = arith.constant dense<0.000000e+00> : vector<16x32xf32>
    %52 = tpu.matmul %50, %51, %cst_17 {dimension_numbers = #tpu.dot_dimension_numbers<[1], [0], [0], [1], [0, 0, 1, 1], [], []>} : vector<16x8xbf16>, vector<8x32xbf16>, vector<16x32xf32> -> vector<16x32xf32>
    %53 = arith.addf %25, %52 : vector<16x32xf32>
    %54 = vector.extract_strided_slice %15 {offsets = [0, 8], sizes = [16, 8], strides = [1, 1]} : vector<16x32xbf16> to vector<16x8xbf16>
    %55 = vector.shape_cast %54 : vector<16x8xbf16> to vector<2x8x8xbf16>
    %56 = vector.extract_strided_slice %17 {offsets = [0, 8], sizes = [16, 8], strides = [1, 1]} : vector<16x32xbf16> to vector<16x8xbf16>
    %57 = vector.shape_cast %56 : vector<16x8xbf16> to vector<2x8x8xbf16>
    %58 = vector.extract_strided_slice %19 {offsets = [0, 8], sizes = [16, 8], strides = [1, 1]} : vector<16x32xbf16> to vector<16x8xbf16>
    %59 = vector.shape_cast %58 : vector<16x8xbf16> to vector<2x8x8xbf16>
    "tpu.trace_start"() <{level = 10 : i32, message = "bqe,bke->bqk"}> : () -> ()
    %cst_18 = arith.constant dense<0.000000e+00> : vector<2x8x8xf32>
    %60 = tpu.matmul %55, %57, %cst_18 {dimension_numbers = #tpu.dot_dimension_numbers<[2], [2], [1], [1], [0, 0, 0, 1, 1, 1], [0], [0]>} : vector<2x8x8xbf16>, vector<2x8x8xbf16>, vector<2x8x8xf32> -> vector<2x8x8xf32>
    %cst_19 = arith.constant 0xFF800000 : f32
    "tpu.trace_stop"() : () -> ()
    %61 = vector.shape_cast %23 : vector<1x8x8xi1> to vector<1x8x8xi1>
    %62 = vector.broadcast %61 : vector<1x8x8xi1> to vector<2x8x8xi1>
    %63 = vector.broadcast %cst_19 : f32 to vector<2x8x8xf32>
    %64 = arith.select %62, %60, %63 : vector<2x8x8xi1>, vector<2x8x8xf32>
    %cst_20 = arith.constant dense<0xFF800000> : vector<2x8xf32>
    %65 = vector.multi_reduction <maximumf>, %64, %cst_20 [2] : vector<2x8x8xf32> to vector<2x8xf32>
    %66 = vector.shape_cast %65 : vector<2x8xf32> to vector<2x8x1xf32>
    %67 = vector.broadcast %66 : vector<2x8x1xf32> to vector<2x8x8xf32>
    %68 = arith.subf %64, %67 : vector<2x8x8xf32>
    %69 = math.exp %68 : vector<2x8x8xf32>
    %cst_21 = arith.constant dense<0.000000e+00> : vector<2x8xf32>
    %70 = vector.multi_reduction <add>, %69, %cst_21 [2] : vector<2x8x8xf32> to vector<2x8xf32>
    %71 = vector.shape_cast %70 : vector<2x8xf32> to vector<2x8x1xf32>
    %72 = tpu.reciprocal %71 {approx = true} : vector<2x8x1xf32> -> vector<2x8x1xf32>
    %73 = vector.broadcast %72 : vector<2x8x1xf32> to vector<2x8x8xf32>
    %74 = arith.mulf %69, %73 : vector<2x8x8xf32>
    %75 = arith.truncf %74 : vector<2x8x8xf32> to vector<2x8x8xbf16>
    "tpu.trace_start"() <{level = 10 : i32, message = "bqk,bke->bqe"}> : () -> ()
    %cst_22 = arith.constant dense<0.000000e+00> : vector<2x8x8xf32>
    %76 = tpu.matmul %75, %59, %cst_22 {dimension_numbers = #tpu.dot_dimension_numbers<[2], [1], [1], [2], [0, 0, 0, 1, 1, 2], [0], [0]>} : vector<2x8x8xbf16>, vector<2x8x8xbf16>, vector<2x8x8xf32> -> vector<2x8x8xf32>
    "tpu.trace_stop"() : () -> ()
    %77 = vector.shape_cast %76 : vector<2x8x8xf32> to vector<16x8xf32>
    %78 = arith.truncf %77 : vector<16x8xf32> to vector<16x8xbf16>
    %79 = vector.extract_strided_slice %24 {offsets = [8, 0], sizes = [8, 32], strides = [1, 1]} : vector<32x32xbf16> to vector<8x32xbf16>
    %cst_23 = arith.constant dense<0.000000e+00> : vector<16x32xf32>
    %80 = tpu.matmul %78, %79, %cst_23 {dimension_numbers = #tpu.dot_dimension_numbers<[1], [0], [0], [1], [0, 0, 1, 1], [], []>} : vector<16x8xbf16>, vector<8x32xbf16>, vector<16x32xf32> -> vector<16x32xf32>
    %81 = arith.addf %53, %80 : vector<16x32xf32>
    %82 = vector.extract_strided_slice %15 {offsets = [0, 16], sizes = [16, 8], strides = [1, 1]} : vector<16x32xbf16> to vector<16x8xbf16>
    %83 = vector.shape_cast %82 : vector<16x8xbf16> to vector<2x8x8xbf16>
    %84 = vector.extract_strided_slice %17 {offsets = [0, 16], sizes = [16, 8], strides = [1, 1]} : vector<16x32xbf16> to vector<16x8xbf16>
    %85 = vector.shape_cast %84 : vector<16x8xbf16> to vector<2x8x8xbf16>
    %86 = vector.extract_strided_slice %19 {offsets = [0, 16], sizes = [16, 8], strides = [1, 1]} : vector<16x32xbf16> to vector<16x8xbf16>
    %87 = vector.shape_cast %86 : vector<16x8xbf16> to vector<2x8x8xbf16>
    "tpu.trace_start"() <{level = 10 : i32, message = "bqe,bke->bqk"}> : () -> ()
    %cst_24 = arith.constant dense<0.000000e+00> : vector<2x8x8xf32>
    %88 = tpu.matmul %83, %85, %cst_24 {dimension_numbers = #tpu.dot_dimension_numbers<[2], [2], [1], [1], [0, 0, 0, 1, 1, 1], [0], [0]>} : vector<2x8x8xbf16>, vector<2x8x8xbf16>, vector<2x8x8xf32> -> vector<2x8x8xf32>
    %cst_25 = arith.constant 0xFF800000 : f32
    "tpu.trace_stop"() : () -> ()
    %89 = vector.shape_cast %23 : vector<1x8x8xi1> to vector<1x8x8xi1>
    %90 = vector.broadcast %89 : vector<1x8x8xi1> to vector<2x8x8xi1>
    %91 = vector.broadcast %cst_25 : f32 to vector<2x8x8xf32>
    %92 = arith.select %90, %88, %91 : vector<2x8x8xi1>, vector<2x8x8xf32>
    %cst_26 = arith.constant dense<0xFF800000> : vector<2x8xf32>
    %93 = vector.multi_reduction <maximumf>, %92, %cst_26 [2] : vector<2x8x8xf32> to vector<2x8xf32>
    %94 = vector.shape_cast %93 : vector<2x8xf32> to vector<2x8x1xf32>
    %95 = vector.broadcast %94 : vector<2x8x1xf32> to vector<2x8x8xf32>
    %96 = arith.subf %92, %95 : vector<2x8x8xf32>
    %97 = math.exp %96 : vector<2x8x8xf32>
    %cst_27 = arith.constant dense<0.000000e+00> : vector<2x8xf32>
    %98 = vector.multi_reduction <add>, %97, %cst_27 [2] : vector<2x8x8xf32> to vector<2x8xf32>
    %99 = vector.shape_cast %98 : vector<2x8xf32> to vector<2x8x1xf32>
    %100 = tpu.reciprocal %99 {approx = true} : vector<2x8x1xf32> -> vector<2x8x1xf32>
    %101 = vector.broadcast %100 : vector<2x8x1xf32> to vector<2x8x8xf32>
    %102 = arith.mulf %97, %101 : vector<2x8x8xf32>
    %103 = arith.truncf %102 : vector<2x8x8xf32> to vector<2x8x8xbf16>
    "tpu.trace_start"() <{level = 10 : i32, message = "bqk,bke->bqe"}> : () -> ()
    %cst_28 = arith.constant dense<0.000000e+00> : vector<2x8x8xf32>
    %104 = tpu.matmul %103, %87, %cst_28 {dimension_numbers = #tpu.dot_dimension_numbers<[2], [1], [1], [2], [0, 0, 0, 1, 1, 2], [0], [0]>} : vector<2x8x8xbf16>, vector<2x8x8xbf16>, vector<2x8x8xf32> -> vector<2x8x8xf32>
    "tpu.trace_stop"() : () -> ()
    %105 = vector.shape_cast %104 : vector<2x8x8xf32> to vector<16x8xf32>
    %106 = arith.truncf %105 : vector<16x8xf32> to vector<16x8xbf16>
    %107 = vector.extract_strided_slice %24 {offsets = [16, 0], sizes = [8, 32], strides = [1, 1]} : vector<32x32xbf16> to vector<8x32xbf16>
    %cst_29 = arith.constant dense<0.000000e+00> : vector<16x32xf32>
    %108 = tpu.matmul %106, %107, %cst_29 {dimension_numbers = #tpu.dot_dimension_numbers<[1], [0], [0], [1], [0, 0, 1, 1], [], []>} : vector<16x8xbf16>, vector<8x32xbf16>, vector<16x32xf32> -> vector<16x32xf32>
    %109 = arith.addf %81, %108 : vector<16x32xf32>
    %110 = vector.extract_strided_slice %15 {offsets = [0, 24], sizes = [16, 8], strides = [1, 1]} : vector<16x32xbf16> to vector<16x8xbf16>
    %111 = vector.shape_cast %110 : vector<16x8xbf16> to vector<2x8x8xbf16>
    %112 = vector.extract_strided_slice %17 {offsets = [0, 24], sizes = [16, 8], strides = [1, 1]} : vector<16x32xbf16> to vector<16x8xbf16>
    %113 = vector.shape_cast %112 : vector<16x8xbf16> to vector<2x8x8xbf16>
    %114 = vector.extract_strided_slice %19 {offsets = [0, 24], sizes = [16, 8], strides = [1, 1]} : vector<16x32xbf16> to vector<16x8xbf16>
    %115 = vector.shape_cast %114 : vector<16x8xbf16> to vector<2x8x8xbf16>
    "tpu.trace_start"() <{level = 10 : i32, message = "bqe,bke->bqk"}> : () -> ()
    %cst_30 = arith.constant dense<0.000000e+00> : vector<2x8x8xf32>
    %116 = tpu.matmul %111, %113, %cst_30 {dimension_numbers = #tpu.dot_dimension_numbers<[2], [2], [1], [1], [0, 0, 0, 1, 1, 1], [0], [0]>} : vector<2x8x8xbf16>, vector<2x8x8xbf16>, vector<2x8x8xf32> -> vector<2x8x8xf32>
    %cst_31 = arith.constant 0xFF800000 : f32
    "tpu.trace_stop"() : () -> ()
    %117 = vector.shape_cast %23 : vector<1x8x8xi1> to vector<1x8x8xi1>
    %118 = vector.broadcast %117 : vector<1x8x8xi1> to vector<2x8x8xi1>
    %119 = vector.broadcast %cst_31 : f32 to vector<2x8x8xf32>
    %120 = arith.select %118, %116, %119 : vector<2x8x8xi1>, vector<2x8x8xf32>
    %cst_32 = arith.constant dense<0xFF800000> : vector<2x8xf32>
    %121 = vector.multi_reduction <maximumf>, %120, %cst_32 [2] : vector<2x8x8xf32> to vector<2x8xf32>
    %122 = vector.shape_cast %121 : vector<2x8xf32> to vector<2x8x1xf32>
    %123 = vector.broadcast %122 : vector<2x8x1xf32> to vector<2x8x8xf32>
    %124 = arith.subf %120, %123 : vector<2x8x8xf32>
    %125 = math.exp %124 : vector<2x8x8xf32>
    %cst_33 = arith.constant dense<0.000000e+00> : vector<2x8xf32>
    %126 = vector.multi_reduction <add>, %125, %cst_33 [2] : vector<2x8x8xf32> to vector<2x8xf32>
    %127 = vector.shape_cast %126 : vector<2x8xf32> to vector<2x8x1xf32>
    %128 = tpu.reciprocal %127 {approx = true} : vector<2x8x1xf32> -> vector<2x8x1xf32>
    %129 = vector.broadcast %128 : vector<2x8x1xf32> to vector<2x8x8xf32>
    %130 = arith.mulf %125, %129 : vector<2x8x8xf32>
    %131 = arith.truncf %130 : vector<2x8x8xf32> to vector<2x8x8xbf16>
    "tpu.trace_start"() <{level = 10 : i32, message = "bqk,bke->bqe"}> : () -> ()
    %cst_34 = arith.constant dense<0.000000e+00> : vector<2x8x8xf32>
    %132 = tpu.matmul %131, %115, %cst_34 {dimension_numbers = #tpu.dot_dimension_numbers<[2], [1], [1], [2], [0, 0, 0, 1, 1, 2], [0], [0]>} : vector<2x8x8xbf16>, vector<2x8x8xbf16>, vector<2x8x8xf32> -> vector<2x8x8xf32>
    "tpu.trace_stop"() : () -> ()
    %133 = vector.shape_cast %132 : vector<2x8x8xf32> to vector<16x8xf32>
    %134 = arith.truncf %133 : vector<16x8xf32> to vector<16x8xbf16>
    %135 = vector.extract_strided_slice %24 {offsets = [24, 0], sizes = [8, 32], strides = [1, 1]} : vector<32x32xbf16> to vector<8x32xbf16>
    %cst_35 = arith.constant dense<0.000000e+00> : vector<16x32xf32>
    %136 = tpu.matmul %134, %135, %cst_35 {dimension_numbers = #tpu.dot_dimension_numbers<[1], [0], [0], [1], [0, 0, 1, 1], [], []>} : vector<16x8xbf16>, vector<8x32xbf16>, vector<16x32xf32> -> vector<16x32xf32>
    %137 = arith.addf %109, %136 : vector<16x32xf32>
    %c0_36 = arith.constant 0 : index
    %c0_37 = arith.constant 0 : index
    %138 = vector.load %arg6[%c0_36, %c0_37] : memref<1x32xf32, #tpu.memory_space<vmem>>, vector<1x32xf32>
    %139 = vector.broadcast %138 : vector<1x32xf32> to vector<16x32xf32>
    %140 = arith.addf %137, %139 : vector<16x32xf32>
    %141 = arith.addf %5, %140 : vector<16x32xf32>
    %c0_38 = arith.constant 0 : index
    %c0_39 = arith.constant 0 : index
    %142 = vector.load %arg7[%c0_38, %c0_39] : memref<1x32xf32, #tpu.memory_space<vmem>>, vector<1x32xf32>
    %c0_40 = arith.constant 0 : index
    %c0_41 = arith.constant 0 : index
    %143 = vector.load %arg8[%c0_40, %c0_41] : memref<1x32xf32, #tpu.memory_space<vmem>>, vector<1x32xf32>
    %cst_42 = arith.constant dense<0.000000e+00> : vector<16xf32>
    %144 = vector.multi_reduction <add>, %141, %cst_42 [1] : vector<16x32xf32> to vector<16xf32>
    %145 = vector.shape_cast %144 : vector<16xf32> to vector<16x1xf32>
    %cst_43 = arith.constant 3.200000e+01 : f32
    %146 = vector.broadcast %cst_43 : f32 to vector<16x1xf32>
    %147 = arith.divf %145, %146 : vector<16x1xf32>
    %148 = vector.broadcast %147 : vector<16x1xf32> to vector<16x32xf32>
    %149 = arith.subf %141, %148 : vector<16x32xf32>
    %150 = arith.mulf %149, %149 : vector<16x32xf32>
    %cst_44 = arith.constant dense<0.000000e+00> : vector<16xf32>
    %151 = vector.multi_reduction <add>, %150, %cst_44 [1] : vector<16x32xf32> to vector<16xf32>
    %152 = vector.shape_cast %151 : vector<16xf32> to vector<16x1xf32>
    %cst_45 = arith.constant 3.200000e+01 : f32
    %153 = vector.broadcast %cst_45 : f32 to vector<16x1xf32>
    %154 = arith.divf %152, %153 : vector<16x1xf32>
    %155 = vector.broadcast %147 : vector<16x1xf32> to vector<16x32xf32>
    %156 = arith.subf %141, %155 : vector<16x32xf32>
    %cst_46 = arith.constant 9.99999974E-6 : f32
    %157 = vector.broadcast %cst_46 : f32 to vector<16x1xf32>
    %158 = arith.addf %154, %157 : vector<16x1xf32>
    %159 = math.rsqrt %158 : vector<16x1xf32>
    %160 = vector.broadcast %159 : vector<16x1xf32> to vector<16x32xf32>
    %161 = arith.mulf %156, %160 : vector<16x32xf32>
    %162 = vector.broadcast %142 : vector<1x32xf32> to vector<16x32xf32>
    %163 = arith.mulf %161, %162 : vector<16x32xf32>
    %164 = vector.broadcast %143 : vector<1x32xf32> to vector<16x32xf32>
    %165 = arith.addf %163, %164 : vector<16x32xf32>
    %166 = arith.truncf %165 : vector<16x32xf32> to vector<16x32xbf16>
    %c0_47 = arith.constant 0 : index
    %c0_48 = arith.constant 0 : index
    %167 = vector.load %arg9[%c0_47, %c0_48] : memref<32x64xbf16, #tpu.memory_space<vmem>>, vector<32x64xbf16>
    %cst_49 = arith.constant dense<0.000000e+00> : vector<16x64xf32>
    %168 = tpu.matmul %166, %167, %cst_49 {dimension_numbers = #tpu.dot_dimension_numbers<[1], [0], [0], [1], [0, 0, 1, 1], [], []>} : vector<16x32xbf16>, vector<32x64xbf16>, vector<16x64xf32> -> vector<16x64xf32>
    %c0_50 = arith.constant 0 : index
    %c0_51 = arith.constant 0 : index
    %169 = vector.load %arg10[%c0_50, %c0_51] : memref<1x64xf32, #tpu.memory_space<vmem>>, vector<1x64xf32>
    %170 = vector.broadcast %169 : vector<1x64xf32> to vector<16x64xf32>
    %171 = arith.addf %168, %170 : vector<16x64xf32>
    %cst_52 = arith.constant 0.000000e+00 : f32
    %172 = vector.broadcast %cst_52 : f32 to vector<16x64xf32>
    %173 = arith.maximumf %171, %172 : vector<16x64xf32>
    %174 = arith.truncf %173 : vector<16x64xf32> to vector<16x64xbf16>
    %c0_53 = arith.constant 0 : index
    %c0_54 = arith.constant 0 : index
    %175 = vector.load %arg11[%c0_53, %c0_54] : memref<64x32xbf16, #tpu.memory_space<vmem>>, vector<64x32xbf16>
    %cst_55 = arith.constant dense<0.000000e+00> : vector<16x32xf32>
    %176 = tpu.matmul %174, %175, %cst_55 {dimension_numbers = #tpu.dot_dimension_numbers<[1], [0], [0], [1], [0, 0, 1, 1], [], []>} : vector<16x64xbf16>, vector<64x32xbf16>, vector<16x32xf32> -> vector<16x32xf32>
    %c0_56 = arith.constant 0 : index
    %c0_57 = arith.constant 0 : index
    %177 = vector.load %arg12[%c0_56, %c0_57] : memref<1x32xf32, #tpu.memory_space<vmem>>, vector<1x32xf32>
    %178 = vector.broadcast %177 : vector<1x32xf32> to vector<16x32xf32>
    %179 = arith.addf %176, %178 : vector<16x32xf32>
    %180 = arith.addf %165, %179 : vector<16x32xf32>
    %c0_58 = arith.constant 0 : index
    %c0_59 = arith.constant 0 : index
    %181 = vector.load %arg13[%c0_58, %c0_59] : memref<1x32xf32, #tpu.memory_space<vmem>>, vector<1x32xf32>
    %c0_60 = arith.constant 0 : index
    %c0_61 = arith.constant 0 : index
    %182 = vector.load %arg14[%c0_60, %c0_61] : memref<1x32xf32, #tpu.memory_space<vmem>>, vector<1x32xf32>
    %cst_62 = arith.constant dense<0.000000e+00> : vector<16xf32>
    %183 = vector.multi_reduction <add>, %180, %cst_62 [1] : vector<16x32xf32> to vector<16xf32>
    %184 = vector.shape_cast %183 : vector<16xf32> to vector<16x1xf32>
    %cst_63 = arith.constant 3.200000e+01 : f32
    %185 = vector.broadcast %cst_63 : f32 to vector<16x1xf32>
    %186 = arith.divf %184, %185 : vector<16x1xf32>
    %187 = vector.broadcast %186 : vector<16x1xf32> to vector<16x32xf32>
    %188 = arith.subf %180, %187 : vector<16x32xf32>
    %189 = arith.mulf %188, %188 : vector<16x32xf32>
    %cst_64 = arith.constant dense<0.000000e+00> : vector<16xf32>
    %190 = vector.multi_reduction <add>, %189, %cst_64 [1] : vector<16x32xf32> to vector<16xf32>
    %191 = vector.shape_cast %190 : vector<16xf32> to vector<16x1xf32>
    %cst_65 = arith.constant 3.200000e+01 : f32
    %192 = vector.broadcast %cst_65 : f32 to vector<16x1xf32>
    %193 = arith.divf %191, %192 : vector<16x1xf32>
    %194 = vector.broadcast %186 : vector<16x1xf32> to vector<16x32xf32>
    %195 = arith.subf %180, %194 : vector<16x32xf32>
    %cst_66 = arith.constant 9.99999974E-6 : f32
    %196 = vector.broadcast %cst_66 : f32 to vector<16x1xf32>
    %197 = arith.addf %193, %196 : vector<16x1xf32>
    %198 = math.rsqrt %197 : vector<16x1xf32>
    %199 = vector.broadcast %198 : vector<16x1xf32> to vector<16x32xf32>
    %200 = arith.mulf %195, %199 : vector<16x32xf32>
    %201 = vector.broadcast %181 : vector<1x32xf32> to vector<16x32xf32>
    %202 = arith.mulf %200, %201 : vector<16x32xf32>
    %203 = vector.broadcast %182 : vector<1x32xf32> to vector<16x32xf32>
    %204 = arith.addf %202, %203 : vector<16x32xf32>
    %c0_67 = arith.constant 0 : index
    %c0_68 = arith.constant 0 : index
    %205 = vector.load %arg15[%c0_67, %c0_68] : memref<1x32xf32, #tpu.memory_space<vmem>>, vector<1x32xf32>
    %206 = vector.broadcast %205 : vector<1x32xf32> to vector<16x32xf32>
    %207 = arith.mulf %204, %206 : vector<16x32xf32>
    %cst_69 = arith.constant dense<0.000000e+00> : vector<16xf32>
    %208 = vector.multi_reduction <add>, %207, %cst_69 [1] : vector<16x32xf32> to vector<16xf32>
    %209 = vector.shape_cast %208 : vector<16xf32> to vector<16x1xf32>
    %c0_70 = arith.constant 0 : index
    %c0_71 = arith.constant 0 : index
    %210 = vector.load %arg16[%c0_70, %c0_71] : memref<1x1xf32, #tpu.memory_space<vmem>>, vector<1x1xf32>
    %211 = vector.broadcast %210 : vector<1x1xf32> to vector<16x1xf32>
    %212 = arith.addf %209, %211 : vector<16x1xf32>
    %213 = vector.shape_cast %212 : vector<16x1xf32> to vector<2x8xf32>
    %c0_72 = arith.constant 0 : index
    %c0_73 = arith.constant 0 : index
    %214 = vector.load %arg17[%c0_72, %c0_73] : memref<2x8xf32, #tpu.memory_space<vmem>>, vector<2x8xf32>
    tpu.vector_store %arg17[%c0_72, %c0_73], %213 {strides = array<i32>} : memref<2x8xf32, #tpu.memory_space<vmem>>, vector<2x8xf32>,
    return
  }
  func.func @transform_0(%arg0: i32) -> (i32, i32, i32) {
    %c0_i32 = arith.constant 0 : i32
    %c0_i32_0 = arith.constant 0 : i32
    %c0_i32_1 = arith.constant 0 : i32
    return %arg0, %c0_i32, %c0_i32_0 : i32, i32, i32
  }
  func.func @transform_1(%arg0: i32) -> (i32, i32) {
    %c0_i32 = arith.constant 0 : i32
    %c0_i32_0 = arith.constant 0 : i32
    %c0_i32_1 = arith.constant 0 : i32
    return %c0_i32, %c0_i32_0 : i32, i32
  }
  func.func @transform_2(%arg0: i32) -> (i32, i32) {
    %c0_i32 = arith.constant 0 : i32
    %c0_i32_0 = arith.constant 0 : i32
    %c0_i32_1 = arith.constant 0 : i32
    return %c0_i32, %c0_i32_0 : i32, i32
  }
  func.func @transform_3(%arg0: i32) -> (i32, i32) {
    %c0_i32 = arith.constant 0 : i32
    %c0_i32_0 = arith.constant 0 : i32
    %c0_i32_1 = arith.constant 0 : i32
    return %c0_i32, %c0_i32_0 : i32, i32
  }
  func.func @transform_4(%arg0: i32) -> (i32, i32) {
    %c0_i32 = arith.constant 0 : i32
    %c0_i32_0 = arith.constant 0 : i32
    %c0_i32_1 = arith.constant 0 : i32
    return %c0_i32, %c0_i32_0 : i32, i32
  }
  func.func @transform_5(%arg0: i32) -> (i32, i32) {
    %c0_i32 = arith.constant 0 : i32
    %c0_i32_0 = arith.constant 0 : i32
    %c0_i32_1 = arith.constant 0 : i32
    return %c0_i32, %c0_i32_0 : i32, i32
  }
  func.func @transform_6(%arg0: i32) -> (i32, i32) {
    %c0_i32 = arith.constant 0 : i32
    %c0_i32_0 = arith.constant 0 : i32
    %c0_i32_1 = arith.constant 0 : i32
    return %c0_i32, %c0_i32_0 : i32, i32
  }
  func.func @transform_7(%arg0: i32) -> (i32, i32) {
    %c0_i32 = arith.constant 0 : i32
    %c0_i32_0 = arith.constant 0 : i32
    %c0_i32_1 = arith.constant 0 : i32
    return %c0_i32, %c0_i32_0 : i32, i32
  }
  func.func @transform_8(%arg0: i32) -> (i32, i32) {
    %c0_i32 = arith.constant 0 : i32
    %c0_i32_0 = arith.constant 0 : i32
    %c0_i32_1 = arith.constant 0 : i32
    return %c0_i32, %c0_i32_0 : i32, i32
  }
  func.func @transform_9(%arg0: i32) -> (i32, i32) {
    %c0_i32 = arith.constant 0 : i32
    %c0_i32_0 = arith.constant 0 : i32
    %c0_i32_1 = arith.constant 0 : i32
    return %c0_i32, %c0_i32_0 : i32, i32
  }
  func.func @transform_10(%arg0: i32) -> (i32, i32) {
    %c0_i32 = arith.constant 0 : i32
    %c0_i32_0 = arith.constant 0 : i32
    %c0_i32_1 = arith.constant 0 : i32
    return %c0_i32, %c0_i32_0 : i32, i32
  }
  func.func @transform_11(%arg0: i32) -> (i32, i32) {
    %c0_i32 = arith.constant 0 : i32
    %c0_i32_0 = arith.constant 0 : i32
    %c0_i32_1 = arith.constant 0 : i32
    return %c0_i32, %c0_i32_0 : i32, i32
  }
  func.func @transform_12(%arg0: i32) -> (i32, i32) {
    %c0_i32 = arith.constant 0 : i32
    %c0_i32_0 = arith.constant 0 : i32
    %c0_i32_1 = arith.constant 0 : i32
    return %c0_i32, %c0_i32_0 : i32, i32
  }
  func.func @transform_13(%arg0: i32) -> (i32, i32) {
    %c0_i32 = arith.constant 0 : i32
    %c0_i32_0 = arith.constant 0 : i32
    %c0_i32_1 = arith.constant 0 : i32
    return %c0_i32, %c0_i32_0 : i32, i32
  }
  func.func @transform_14(%arg0: i32) -> (i32, i32) {
    %c0_i32 = arith.constant 0 : i32
    %c0_i32_0 = arith.constant 0 : i32
    %c0_i32_1 = arith.constant 0 : i32
    return %c0_i32, %c0_i32_0 : i32, i32
  }
  func.func @transform_15(%arg0: i32) -> (i32, i32) {
    %c0_i32 = arith.constant 0 : i32
    %c0_i32_0 = arith.constant 0 : i32
    %c0_i32_1 = arith.constant 0 : i32
    return %c0_i32, %c0_i32_0 : i32, i32
  }
  func.func @transform_16(%arg0: i32) -> (i32, i32) {
    %c0_i32 = arith.constant 0 : i32
    %c0_i32_0 = arith.constant 0 : i32
    return %arg0, %c0_i32 : i32, i32
  }
}

</mosaic_0001>

<llo_original>
// kernel: tpu_custom_call.1
$region0: #{tpu_custom_call.1}
  #allocation0 [shape = 'u32[]', space=smem, size = 0x4, offset = 0x4, fixed_abs, tag = 'smem constant byte address 0x4 - core index']
  #allocation1 [shape = 'u32[72,128]{1,0:T(1,128)}', space=vmem, size = 0x9000, scoped, tag = 'internal scratch']
  #allocation2 [shape = 'f32[1,1]{1,0:T(1,128)S(1)}', space=vmem, size = 0x200, scoped, tag = 'scoped memory for tpu_custom_call.1']
  %s0 = inlined_call_operand.vmem [shape: f32[2,8,32], index: 0, kind: input, shape index: {}]
  %s1 = inlined_call_operand.hbm [shape: f32[8,32], index: 1, kind: input, shape index: {}]
  %s2 = inlined_call_operand.vmem [shape: bf16[32,96], index: 2, kind: input, shape index: {}]
  %s3 = inlined_call_operand.vmem [shape: f32[1,96], index: 3, kind: input, shape index: {}]
  %s4 = inlined_call_operand.vmem [shape: bf16[32,32], index: 4, kind: input, shape index: {}]
  %s5 = inlined_call_operand.vmem [shape: f32[1,32], index: 5, kind: input, shape index: {}]
  %s6 = inlined_call_operand.vmem [shape: f32[1,32], index: 6, kind: input, shape index: {}]
  %s7 = inlined_call_operand.vmem [shape: f32[1,32], index: 7, kind: input, shape index: {}]
  %s8 = inlined_call_operand.hbm [shape: bf16[32,64], index: 8, kind: input, shape index: {}]
  %s9 = inlined_call_operand.vmem [shape: f32[1,64], index: 9, kind: input, shape index: {}]
  %s10 = inlined_call_operand.vmem [shape: bf16[64,32], index: 10, kind: input, shape index: {}]
  %s11 = inlined_call_operand.vmem [shape: f32[1,32], index: 11, kind: input, shape index: {}]
  %s12 = inlined_call_operand.vmem [shape: f32[1,32], index: 12, kind: input, shape index: {}]
  %s13 = inlined_call_operand.vmem [shape: f32[1,32], index: 13, kind: input, shape index: {}]
  %s14 = inlined_call_operand.vmem [shape: f32[1,32], index: 14, kind: input, shape index: {}]
  %s15 = inlined_call_operand.<no memory space> [shape: f32[1,1], index: 15, kind: input, shape index: {}]
  %s16 = inlined_call_operand.hbm [shape: f32[2,8], index: 16, kind: output, shape index: {}]
  %s17 = sld [smem:[#allocation0]]
  $region82: #{tpu_custom_call.1} parent=0
    _
  %s19 = ssub.s32 1, %s17
  %s20 = scalar_select 0, %s19, %s17
  %v21 = vstv %s15
  %22 = vst [vmem:[#allocation2] sm:$0x1] %v21
  $region1: #{tpu_custom_call.1} parent=0
    #allocation3 [shape = 'u8[4096]{0}', space=vmem, size = 0x1000, scoped, tag = 'input window, operand 1, single buffered']
    #allocation4 [shape = 's32[1]{0}', space=sflag, size = 0x4, scoped, tag = 'scoped memory for tpu_custom_call.1']
    #allocation5 [shape = 's32[1]{0}', space=sflag, size = 0x4, scoped, tag = 'scoped memory for tpu_custom_call.1']
    #allocation6 [shape = 'u8[8192]{0}', space=vmem, size = 0x2000, scoped, tag = 'input window, operand 8, single buffered']
    #allocation7 [shape = 's32[1]{0}', space=sflag, size = 0x4, scoped, tag = 'scoped memory for tpu_custom_call.1']
    #allocation8 [shape = 'u8[1024]{0}', space=vmem, size = 0x400, scoped, tag = 'output window, operand 0, single buffered']
    %23 = vsyncpa [#allocation4], 0
    %24 = vsyncpa [#allocation7], 0
    %25 = vsyncpa [#allocation5], 0
    // Predicated region
    $region2: #{tpu_custom_call.1} parent=1 // pred_check
      _
    $region3: #{tpu_custom_call.1} parent=1 // pred_check_branch
      %27 = sbr.rel (0) target = $region5
    $region4: #{tpu_custom_call.1} parent=1 // pred_region
      _
    $region5: #{tpu_custom_call.1} parent=1 // pred_fallthru
      _
    // Predicated region
    $region6: #{tpu_custom_call.1} parent=1 // pred_check
      _
    $region7: #{tpu_custom_call.1} parent=1 // pred_check_branch
      %29 = sbr.rel (0) target = $region9
    $region8: #{tpu_custom_call.1} parent=1 // pred_region
      %31 = vsyncadd [#allocation4], 0
      %s33 = sshll.u32 %s1, 4
      %s34 = int_to_ptr.hbm [resolvable:$true] %s33
      %s35 = sshll.u32 [#allocation3], 4
      %s36 = int_to_ptr.vmem [resolvable:$true] %s35
      %38 = dma.hbm_to_vmem [thread:$0]  %s34, 128, %s36, [#allocation4]
    $region9: #{tpu_custom_call.1} parent=1 // pred_fallthru
      _
    // Predicated region
    $region10: #{tpu_custom_call.1} parent=1 // pred_check
      _
    $region11: #{tpu_custom_call.1} parent=1 // pred_check_branch
      %40 = sbr.rel (0) target = $region13
    $region12: #{tpu_custom_call.1} parent=1 // pred_region
      _
    $region13: #{tpu_custom_call.1} parent=1 // pred_fallthru
      _
    // Predicated region
    $region14: #{tpu_custom_call.1} parent=1 // pred_check
      _
    $region15: #{tpu_custom_call.1} parent=1 // pred_check_branch
      %42 = sbr.rel (0) target = $region17
    $region16: #{tpu_custom_call.1} parent=1 // pred_region
      _
    $region17: #{tpu_custom_call.1} parent=1 // pred_fallthru
      _
    // Predicated region
    $region18: #{tpu_custom_call.1} parent=1 // pred_check
      _
    $region19: #{tpu_custom_call.1} parent=1 // pred_check_branch
      %44 = sbr.rel (0) target = $region21
    $region20: #{tpu_custom_call.1} parent=1 // pred_region
      _
    $region21: #{tpu_custom_call.1} parent=1 // pred_fallthru
      _
    // Predicated region
    $region22: #{tpu_custom_call.1} parent=1 // pred_check
      _
    $region23: #{tpu_custom_call.1} parent=1 // pred_check_branch
      %46 = sbr.rel (0) target = $region25
    $region24: #{tpu_custom_call.1} parent=1 // pred_region
      _
    $region25: #{tpu_custom_call.1} parent=1 // pred_fallthru
      _
    // Predicated region
    $region26: #{tpu_custom_call.1} parent=1 // pred_check
      _
    $region27: #{tpu_custom_call.1} parent=1 // pred_check_branch
      %48 = sbr.rel (0) target = $region29
    $region28: #{tpu_custom_call.1} parent=1 // pred_region
      _
    $region29: #{tpu_custom_call.1} parent=1 // pred_fallthru
      _
    // Predicated region
    $region30: #{tpu_custom_call.1} parent=1 // pred_check
      _
    $region31: #{tpu_custom_call.1} parent=1 // pred_check_branch
      %50 = sbr.rel (0) target = $region33
    $region32: #{tpu_custom_call.1} parent=1 // pred_region
      _
    $region33: #{tpu_custom_call.1} parent=1 // pred_fallthru
      _
    // Predicated region
    $region34: #{tpu_custom_call.1} parent=1 // pred_check
      _
    $region35: #{tpu_custom_call.1} parent=1 // pred_check_branch
      %52 = sbr.rel (0) target = $region37
    $region36: #{tpu_custom_call.1} parent=1 // pred_region
      %54 = vsyncadd [#allocation7], 0
      %s55 = sshll.u32 %s8, 4
      %s56 = int_to_ptr.hbm [resolvable:$true] %s55
      %s57 = sshll.u32 [#allocation6], 4
      %s58 = int_to_ptr.vmem [resolvable:$true] %s57
      %63 = dma.hbm_to_vmem [thread:$0]  %s56, 256, %s58, [#allocation7], 64, 64, 4
    $region37: #{tpu_custom_call.1} parent=1 // pred_fallthru
      _
    // Predicated region
    $region38: #{tpu_custom_call.1} parent=1 // pred_check
      _
    $region39: #{tpu_custom_call.1} parent=1 // pred_check_branch
      %65 = sbr.rel (0) target = $region41
    $region40: #{tpu_custom_call.1} parent=1 // pred_region
      _
    $region41: #{tpu_custom_call.1} parent=1 // pred_fallthru
      _
    // Predicated region
    $region42: #{tpu_custom_call.1} parent=1 // pred_check
      _
    $region43: #{tpu_custom_call.1} parent=1 // pred_check_branch
      %67 = sbr.rel (0) target = $region45
    $region44: #{tpu_custom_call.1} parent=1 // pred_region
      _
    $region45: #{tpu_custom_call.1} parent=1 // pred_fallthru
      _
    // Predicated region
    $region46: #{tpu_custom_call.1} parent=1 // pred_check
      _
    $region47: #{tpu_custom_call.1} parent=1 // pred_check_branch
      %69 = sbr.rel (0) target = $region49
    $region48: #{tpu_custom_call.1} parent=1 // pred_region
      _
    $region49: #{tpu_custom_call.1} parent=1 // pred_fallthru
      _
    // Predicated region
    $region50: #{tpu_custom_call.1} parent=1 // pred_check
      _
    $region51: #{tpu_custom_call.1} parent=1 // pred_check_branch
      %71 = sbr.rel (0) target = $region53
    $region52: #{tpu_custom_call.1} parent=1 // pred_region
      _
    $region53: #{tpu_custom_call.1} parent=1 // pred_fallthru
      _
    // Predicated region
    $region54: #{tpu_custom_call.1} parent=1 // pred_check
      _
    $region55: #{tpu_custom_call.1} parent=1 // pred_check_branch
      %73 = sbr.rel (0) target = $region57
    $region56: #{tpu_custom_call.1} parent=1 // pred_region
      _
    $region57: #{tpu_custom_call.1} parent=1 // pred_fallthru
      _
    // Predicated region
    $region58: #{tpu_custom_call.1} parent=1 // pred_check
      _
    $region59: #{tpu_custom_call.1} parent=1 // pred_check_branch
      %75 = sbr.rel (0) target = $region61
    $region60: #{tpu_custom_call.1} parent=1 // pred_region
      _
    $region61: #{tpu_custom_call.1} parent=1 // pred_fallthru
      _
    // Predicated region
    $region62: #{tpu_custom_call.1} parent=1 // pred_check
      _
    $region63: #{tpu_custom_call.1} parent=1 // pred_check_branch
      %77 = sbr.rel (0) target = $region65
    $region64: #{tpu_custom_call.1} parent=1 // pred_region
      _
    $region65: #{tpu_custom_call.1} parent=1 // pred_fallthru
      _
    // Predicated region
    $region66: #{tpu_custom_call.1} parent=1 // pred_check
      _
    $region67: #{tpu_custom_call.1} parent=1 // pred_check_branch
      %79 = sbr.rel (0) target = $region69
    $region68: #{tpu_custom_call.1} parent=1 // pred_region
      %81 = dma.done [#allocation4], 128
    $region69: #{tpu_custom_call.1} parent=1 // pred_fallthru
      _
    // Predicated region
    $region70: #{tpu_custom_call.1} parent=1 // pred_check
      _
    $region71: #{tpu_custom_call.1} parent=1 // pred_check_branch
      %83 = sbr.rel (0) target = $region73
    $region72: #{tpu_custom_call.1} parent=1 // pred_region
      %85 = dma.done [#allocation7], 256
    $region73: #{tpu_custom_call.1} parent=1 // pred_fallthru
      _
    %v87 = vld [vmem:[%s0] sm:$0xff]
    %v88 = vld [vmem:[%s0 + $0x8] sm:$0xff]
    %v89 = vld [vmem:[#allocation3] sm:$0xff]
    %v90 = vadd.f32 %v87, %v89
    %v91 = vadd.f32 %v88, %v89
    %v92 = vpack.c.bf16 %v91, %v90
    %v93 = vld [vmem:[%s2] sm:$0xf]
    %v94 = vld [vmem:[%s2 + $0x4] sm:$0xf]
    %v95 = vld [vmem:[%s2 + $0x8] sm:$0xf]
    %v96 = vld [vmem:[%s2 + $0xc] sm:$0xf]
    %v97 = vld [vmem:[%s3] sm:$0x1]
    %v99 = vperm.slane %v97, 0
    %v105 = vunpack.c.l.b16 %v93
    %v106 = vunpack.c.l.b16 %v94
    %v107 = vunpack.c.l.b16 %v95
    %v108 = vunpack.c.l.b16 %v96
    %v109 = vpack.c.b16 %v106, %v105
    %v110 = vpack.c.b16 %v108, %v107
    %vm113 = vcmask 261120
    %v115 = vsel %vm113, %v92, 0
    %117 = vmatpush.bf16.msra.mxu0 0
    %118 = vmatpush.bf16.msra.mxu0 0
    %119 = vmatpush.bf16.msra.mxu0 0
    %120 = vmatpush.bf16.msra.mxu0 0
    %121 = vmatpush.bf16.msra.mxu0 0
    %122 = vmatpush.bf16.msra.mxu0 0
    %123 = vmatpush.bf16.msra.mxu0 %v110
    %124 = vmatpush.bf16.msra.mxu0 %v109
    %125 = vmatmul.bf16.gmra.mxu0 %v115
    %v126 = vpop.f32.mrf.mxu0
    %v127 = vadd.f32 %v99, %v126
    %v128 = vpop.f32.mrf.mxu0
    %v129 = vadd.f32 %v99, %v128
    %130 = vdwg.mxu0
    %v131 = vmul.f32 %v127, 0.35355338
    %v132 = vmul.f32 %v129, 0.35355338
    %v133 = vpack.c.bf16 %v131, %v131
    %v134 = vpack.c.bf16 %v132, %v132
    %v135 = vpack.c.bf16 %v127, %v127
    %v136 = vpack.c.bf16 %v129, %v129
    %v137 = vlaneseq
    %v138 = vshrl.u32 %v137, 7
    %v139 = vlaneseq
    %v140 = vand.u32 %v139, 127
    %vm141 = vcmp.le.s32.totalorder %v140, %v138
    %v142 = vld [vmem:[%s4] sm:$0xf]
    %v143 = vld [vmem:[%s4 + $0x4] sm:$0xf]
    %v144 = vld [vmem:[%s4 + $0x8] sm:$0xf]
    %v145 = vld [vmem:[%s4 + $0xc] sm:$0xf]
    %v147 = vunpack.c.l.b16 %v135
    %v148 = vpack.c.b16 %v147, %v147
    %149 = vrot.lane.b32.xlu0 %v148, 96
    %v150 = vpop.permute.xlu0 %149
    %vm151 = vcmask 64512
    %v153 = vsel %vm151, %v133, 0
    %v156 = vsel %vm151, %v150, 0
    %158 = vmatpush.bf16.xpose.msra.mxu0 0
    %159 = vmatpush.bf16.xpose.msra.mxu0 0
    %160 = vmatpush.bf16.xpose.msra.mxu0 0
    %161 = vmatpush.bf16.xpose.msra.mxu0 0
    %162 = vmatpush.bf16.xpose.msra.mxu0 0
    %163 = vmatpush.bf16.xpose.msra.mxu0 0
    %164 = vmatpush.bf16.xpose.msra.mxu0 0
    %165 = vmatpush.bf16.xpose.msra.mxu0 %v156
    %166 = vmatmul.bf16.gmra.mxu0 %v153
    %v167 = vpop.f32.mrf.mxu0
    %v168 = vadd.f32 0.0, %v167
    %v169 = vpop.f32.mrf.mxu0
    %170 = vdwg.mxu0
    %v172 = vunpack.c.l.b16 %v136
    %v173 = vpack.c.b16 %v172, %v172
    %174 = vrot.lane.b32.xlu0 %v173, 96
    %v175 = vpop.permute.xlu0 %174
    %v177 = vsel %vm151, %v134, 0
    %v180 = vsel %vm151, %v175, 0
    %182 = vmatpush.bf16.xpose.msra.mxu0 0
    %183 = vmatpush.bf16.xpose.msra.mxu0 0
    %184 = vmatpush.bf16.xpose.msra.mxu0 0
    %185 = vmatpush.bf16.xpose.msra.mxu0 0
    %186 = vmatpush.bf16.xpose.msra.mxu0 0
    %187 = vmatpush.bf16.xpose.msra.mxu0 0
    %188 = vmatpush.bf16.xpose.msra.mxu0 0
    %189 = vmatpush.bf16.xpose.msra.mxu0 %v180
    %190 = vmatmul.bf16.gmra.mxu0 %v177
    %v191 = vpop.f32.mrf.mxu0
    %v192 = vadd.f32 0.0, %v191
    %v193 = vpop.f32.mrf.mxu0
    %194 = vdwg.mxu0
    %v195 = vsel %vm141, 1, 0
    %vm196 = vcmp.eq.s32.totalorder %v195, 1
    %v197 = vsel %vm196, %v168, -inf
    %v198 = vsel %vm196, %v192, -inf
    %v199 = vsel %vm151, %v197, -inf
    %200 = vmax.xlane.f32.xlu0 %v199
    %v201 = vpop.xlane.xlu0 %200
    %v202 = vsel %vm151, %v198, -inf
    %203 = vmax.xlane.f32.xlu0 %v202
    %v204 = vpop.xlane.xlu0 %203
    %v205 = vsub.f32 %v197, %v201
    %v206 = vsub.f32 %v198, %v204
    %v207 = vmul.f32 %v205, 1.442695
    %v208 = vpow.pop %v207
    %v209 = vmul.f32 %v206, 1.442695
    %v210 = vpow.pop %v209
    %v211 = vsel %vm151, %v208, 0.0
    %212 = vadd.xlane.f32.xlu0 %v211
    %v213 = vpop.xlane.xlu0 %212
    %v214 = vsel %vm151, %v210, 0.0
    %215 = vadd.xlane.f32.xlu0 %v214
    %v216 = vpop.xlane.xlu0 %215
    %v217 = vrcp.pop %v213
    %v218 = vrcp.pop %v216
    %v219 = vmul.f32 %v208, %v217
    %v220 = vmul.f32 %v210, %v218
    %v221 = vpack.c.bf16 %v219, %v219
    %v222 = vpack.c.bf16 %v220, %v220
    %223 = vrot.lane.b32.xlu0 %v148, 64
    %v224 = vpop.permute.xlu0 %223
    %v226 = vsel %vm151, %v221, 0
    %vm228 = vcmask 1043456
    %v230 = vsel %vm228, %v224, 0
    %232 = vmatpush.bf16.msra.mxu0 0
    %233 = vmatpush.bf16.msra.mxu0 0
    %234 = vmatpush.bf16.msra.mxu0 0
    %235 = vmatpush.bf16.msra.mxu0 0
    %236 = vmatpush.bf16.msra.mxu0 0
    %237 = vmatpush.bf16.msra.mxu0 0
    %238 = vmatpush.bf16.msra.mxu0 0
    %239 = vmatpush.bf16.msra.mxu0 %v230
    %240 = vmatmul.bf16.gmra.mxu0 %v226
    %v241 = vpop.f32.mrf.mxu0
    %v242 = vadd.f32 0.0, %v241
    %v243 = vpop.f32.mrf.mxu0
    %244 = vdwg.mxu0
    %245 = vrot.lane.b32.xlu0 %v173, 64
    %v246 = vpop.permute.xlu0 %245
    %v248 = vsel %vm151, %v222, 0
    %v251 = vsel %vm228, %v246, 0
    %253 = vmatpush.bf16.msra.mxu0 0
    %254 = vmatpush.bf16.msra.mxu0 0
    %255 = vmatpush.bf16.msra.mxu0 0
    %256 = vmatpush.bf16.msra.mxu0 0
    %257 = vmatpush.bf16.msra.mxu0 0
    %258 = vmatpush.bf16.msra.mxu0 0
    %259 = vmatpush.bf16.msra.mxu0 0
    %260 = vmatpush.bf16.msra.mxu0 %v251
    %261 = vmatmul.bf16.gmra.mxu0 %v248
    %v262 = vpop.f32.mrf.mxu0
    %v263 = vadd.f32 0.0, %v262
    %v264 = vpop.f32.mrf.mxu0
    %265 = vdwg.mxu0
    %v266 = vpack.c.bf16 %v263, %v242
    %v268 = vunpack.c.l.b16 %v133
    %v269 = vpack.c.b16 %v268, %v268
    %270 = vrot.lane.b32.xlu0 %v269, 120
    %v271 = vpop.permute.xlu0 %270
    %272 = vrot.lane.b32.xlu0 %v148, 88
    %v273 = vpop.permute.xlu0 %272
    %v275 = vsel %vm151, %v271, 0
    %v278 = vsel %vm151, %v273, 0
    %280 = vmatpush.bf16.xpose.msra.mxu0 0
    %281 = vmatpush.bf16.xpose.msra.mxu0 0
    %282 = vmatpush.bf16.xpose.msra.mxu0 0
    %283 = vmatpush.bf16.xpose.msra.mxu0 0
    %284 = vmatpush.bf16.xpose.msra.mxu0 0
    %285 = vmatpush.bf16.xpose.msra.mxu0 0
    %286 = vmatpush.bf16.xpose.msra.mxu0 0
    %287 = vmatpush.bf16.xpose.msra.mxu0 %v278
    %288 = vmatmul.bf16.gmra.mxu0 %v275
    %v289 = vpop.f32.mrf.mxu0
    %v290 = vadd.f32 0.0, %v289
    %v291 = vpop.f32.mrf.mxu0
    %292 = vdwg.mxu0
    %v294 = vunpack.c.l.b16 %v134
    %v295 = vpack.c.b16 %v294, %v294
    %296 = vrot.lane.b32.xlu0 %v295, 120
    %v297 = vpop.permute.xlu0 %296
    %298 = vrot.lane.b32.xlu0 %v173, 88
    %v299 = vpop.permute.xlu0 %298
    %v301 = vsel %vm151, %v297, 0
    %v304 = vsel %vm151, %v299, 0
    %306 = vmatpush.bf16.xpose.msra.mxu0 0
    %307 = vmatpush.bf16.xpose.msra.mxu0 0
    %308 = vmatpush.bf16.xpose.msra.mxu0 0
    %309 = vmatpush.bf16.xpose.msra.mxu0 0
    %310 = vmatpush.bf16.xpose.msra.mxu0 0
    %311 = vmatpush.bf16.xpose.msra.mxu0 0
    %312 = vmatpush.bf16.xpose.msra.mxu0 0
    %313 = vmatpush.bf16.xpose.msra.mxu0 %v304
    %314 = vmatmul.bf16.gmra.mxu0 %v301
    %v315 = vpop.f32.mrf.mxu0
    %v316 = vadd.f32 0.0, %v315
    %v317 = vpop.f32.mrf.mxu0
    %318 = vdwg.mxu0
    %v319 = vsel %vm196, %v290, -inf
    %v320 = vsel %vm196, %v316, -inf
    %v321 = vsel %vm151, %v319, -inf
    %322 = vmax.xlane.f32.xlu0 %v321
    %v323 = vpop.xlane.xlu0 %322
    %v324 = vsel %vm151, %v320, -inf
    %325 = vmax.xlane.f32.xlu0 %v324
    %v326 = vpop.xlane.xlu0 %325
    %v327 = vsub.f32 %v319, %v323
    %v328 = vsub.f32 %v320, %v326
    %v329 = vmul.f32 %v327, 1.442695
    %v330 = vpow.pop %v329
    %v331 = vmul.f32 %v328, 1.442695
    %v332 = vpow.pop %v331
    %v333 = vsel %vm151, %v330, 0.0
    %334 = vadd.xlane.f32.xlu0 %v333
    %v335 = vpop.xlane.xlu0 %334
    %v336 = vsel %vm151, %v332, 0.0
    %337 = vadd.xlane.f32.xlu0 %v336
    %v338 = vpop.xlane.xlu0 %337
    %v339 = vrcp.pop %v335
    %v340 = vrcp.pop %v338
    %v341 = vmul.f32 %v330, %v339
    %v342 = vmul.f32 %v332, %v340
    %v343 = vpack.c.bf16 %v341, %v341
    %v344 = vpack.c.bf16 %v342, %v342
    %345 = vrot.lane.b32.xlu0 %v148, 56
    %v346 = vpop.permute.xlu0 %345
    %v348 = vsel %vm151, %v343, 0
    %v351 = vsel %vm228, %v346, 0
    %353 = vmatpush.bf16.msra.mxu0 0
    %354 = vmatpush.bf16.msra.mxu0 0
    %355 = vmatpush.bf16.msra.mxu0 0
    %356 = vmatpush.bf16.msra.mxu0 0
    %357 = vmatpush.bf16.msra.mxu0 0
    %358 = vmatpush.bf16.msra.mxu0 0
    %359 = vmatpush.bf16.msra.mxu0 0
    %360 = vmatpush.bf16.msra.mxu0 %v351
    %361 = vmatmul.bf16.gmra.mxu0 %v348
    %v362 = vpop.f32.mrf.mxu0
    %v363 = vadd.f32 0.0, %v362
    %v364 = vpop.f32.mrf.mxu0
    %365 = vdwg.mxu0
    %366 = vrot.lane.b32.xlu0 %v173, 56
    %v367 = vpop.permute.xlu0 %366
    %v369 = vsel %vm151, %v344, 0
    %v372 = vsel %vm228, %v367, 0
    %374 = vmatpush.bf16.msra.mxu0 0
    %375 = vmatpush.bf16.msra.mxu0 0
    %376 = vmatpush.bf16.msra.mxu0 0
    %377 = vmatpush.bf16.msra.mxu0 0
    %378 = vmatpush.bf16.msra.mxu0 0
    %379 = vmatpush.bf16.msra.mxu0 0
    %380 = vmatpush.bf16.msra.mxu0 0
    %381 = vmatpush.bf16.msra.mxu0 %v372
    %382 = vmatmul.bf16.gmra.mxu0 %v369
    %v383 = vpop.f32.mrf.mxu0
    %v384 = vadd.f32 0.0, %v383
    %v385 = vpop.f32.mrf.mxu0
    %386 = vdwg.mxu0
    %v387 = vpack.c.bf16 %v384, %v363
    %v389 = vsel %vm151, %v387, 0
    %v392 = vsel %vm228, %v143, 0
    %394 = vmatpush.bf16.msra.mxu0 0
    %395 = vmatpush.bf16.msra.mxu0 0
    %396 = vmatpush.bf16.msra.mxu0 0
    %397 = vmatpush.bf16.msra.mxu0 0
    %398 = vmatpush.bf16.msra.mxu0 0
    %399 = vmatpush.bf16.msra.mxu0 0
    %400 = vmatpush.bf16.msra.mxu0 0
    %401 = vmatpush.bf16.msra.mxu0 %v392
    %402 = vmatmul.bf16.gmra.mxu0 %v389
    %v403 = vpop.f32.mrf.mxu0
    %v404 = vadd.f32 0.0, %v403
    %v405 = vpop.f32.mrf.mxu0
    %v406 = vadd.f32 0.0, %v405
    %407 = vdwg.mxu0
    %v409 = vsel %vm151, %v266, 0
    %v412 = vsel %vm228, %v142, 0
    %414 = vmatpush.bf16.msra.mxu0 0
    %415 = vmatpush.bf16.msra.mxu0 0
    %416 = vmatpush.bf16.msra.mxu0 0
    %417 = vmatpush.bf16.msra.mxu0 0
    %418 = vmatpush.bf16.msra.mxu0 0
    %419 = vmatpush.bf16.msra.mxu0 0
    %420 = vmatpush.bf16.msra.mxu0 0
    %421 = vmatpush.bf16.msra.mxu0 %v412
    %422 = vmatmul.bf16.gmra.mxu0 %v409
    %v423 = vpop.f32.mrf.mxu0
    %v424 = vadd.f32 %v404, %v423
    %v425 = vpop.f32.mrf.mxu0
    %v426 = vadd.f32 %v406, %v425
    %427 = vdwg.mxu0
    %428 = vrot.lane.b32.xlu0 %v269, 112
    %v429 = vpop.permute.xlu0 %428
    %430 = vrot.lane.b32.xlu0 %v148, 80
    %v431 = vpop.permute.xlu0 %430
    %v433 = vsel %vm151, %v429, 0
    %v436 = vsel %vm151, %v431, 0
    %438 = vmatpush.bf16.xpose.msra.mxu0 0
    %439 = vmatpush.bf16.xpose.msra.mxu0 0
    %440 = vmatpush.bf16.xpose.msra.mxu0 0
    %441 = vmatpush.bf16.xpose.msra.mxu0 0
    %442 = vmatpush.bf16.xpose.msra.mxu0 0
    %443 = vmatpush.bf16.xpose.msra.mxu0 0
    %444 = vmatpush.bf16.xpose.msra.mxu0 0
    %445 = vmatpush.bf16.xpose.msra.mxu0 %v436
    %446 = vmatmul.bf16.gmra.mxu0 %v433
    %v447 = vpop.f32.mrf.mxu0
    %v448 = vadd.f32 0.0, %v447
    %v449 = vpop.f32.mrf.mxu0
    %450 = vdwg.mxu0
    %451 = vrot.lane.b32.xlu0 %v295, 112
    %v452 = vpop.permute.xlu0 %451
    %453 = vrot.lane.b32.xlu0 %v173, 80
    %v454 = vpop.permute.xlu0 %453
    %v456 = vsel %vm151, %v452, 0
    %v459 = vsel %vm151, %v454, 0
    %461 = vmatpush.bf16.xpose.msra.mxu0 0
    %462 = vmatpush.bf16.xpose.msra.mxu0 0
    %463 = vmatpush.bf16.xpose.msra.mxu0 0
    %464 = vmatpush.bf16.xpose.msra.mxu0 0
    %465 = vmatpush.bf16.xpose.msra.mxu0 0
    %466 = vmatpush.bf16.xpose.msra.mxu0 0
    %467 = vmatpush.bf16.xpose.msra.mxu0 0
    %468 = vmatpush.bf16.xpose.msra.mxu0 %v459
    %469 = vmatmul.bf16.gmra.mxu0 %v456
    %v470 = vpop.f32.mrf.mxu0
    %v471 = vadd.f32 0.0, %v470
    %v472 = vpop.f32.mrf.mxu0
    %473 = vdwg.mxu0
    %v474 = vsel %vm196, %v448, -inf
    %v475 = vsel %vm196, %v471, -inf
    %v476 = vsel %vm151, %v474, -inf
    %477 = vmax.xlane.f32.xlu0 %v476
    %v478 = vpop.xlane.xlu0 %477
    %v479 = vsel %vm151, %v475, -inf
    %480 = vmax.xlane.f32.xlu0 %v479
    %v481 = vpop.xlane.xlu0 %480
    %v482 = vsub.f32 %v474, %v478
    %v483 = vsub.f32 %v475, %v481
    %v484 = vmul.f32 %v482, 1.442695
    %v485 = vpow.pop %v484
    %v486 = vmul.f32 %v483, 1.442695
    %v487 = vpow.pop %v486
    %v488 = vsel %vm151, %v485, 0.0
    %489 = vadd.xlane.f32.xlu0 %v488
    %v490 = vpop.xlane.xlu0 %489
    %v491 = vsel %vm151, %v487, 0.0
    %492 = vadd.xlane.f32.xlu0 %v491
    %v493 = vpop.xlane.xlu0 %492
    %v494 = vrcp.pop %v490
    %v495 = vrcp.pop %v493
    %v496 = vmul.f32 %v485, %v494
    %v497 = vmul.f32 %v487, %v495
    %v498 = vpack.c.bf16 %v496, %v496
    %v499 = vpack.c.bf16 %v497, %v497
    %500 = vrot.lane.b32.xlu0 %v148, 48
    %v501 = vpop.permute.xlu0 %500
    %v503 = vsel %vm151, %v498, 0
    %v506 = vsel %vm228, %v501, 0
    %508 = vmatpush.bf16.msra.mxu0 0
    %509 = vmatpush.bf16.msra.mxu0 0
    %510 = vmatpush.bf16.msra.mxu0 0
    %511 = vmatpush.bf16.msra.mxu0 0
    %512 = vmatpush.bf16.msra.mxu0 0
    %513 = vmatpush.bf16.msra.mxu0 0
    %514 = vmatpush.bf16.msra.mxu0 0
    %515 = vmatpush.bf16.msra.mxu0 %v506
    %516 = vmatmul.bf16.gmra.mxu0 %v503
    %v517 = vpop.f32.mrf.mxu0
    %v518 = vadd.f32 0.0, %v517
    %v519 = vpop.f32.mrf.mxu0
    %520 = vdwg.mxu0
    %521 = vrot.lane.b32.xlu0 %v173, 48
    %v522 = vpop.permute.xlu0 %521
    %v524 = vsel %vm151, %v499, 0
    %v527 = vsel %vm228, %v522, 0
    %529 = vmatpush.bf16.msra.mxu0 0
    %530 = vmatpush.bf16.msra.mxu0 0
    %531 = vmatpush.bf16.msra.mxu0 0
    %532 = vmatpush.bf16.msra.mxu0 0
    %533 = vmatpush.bf16.msra.mxu0 0
    %534 = vmatpush.bf16.msra.mxu0 0
    %535 = vmatpush.bf16.msra.mxu0 0
    %536 = vmatpush.bf16.msra.mxu0 %v527
    %537 = vmatmul.bf16.gmra.mxu0 %v524
    %v538 = vpop.f32.mrf.mxu0
    %v539 = vadd.f32 0.0, %v538
    %v540 = vpop.f32.mrf.mxu0
    %541 = vdwg.mxu0
    %v542 = vpack.c.bf16 %v539, %v518
    %v544 = vsel %vm151, %v542, 0
    %v547 = vsel %vm228, %v144, 0
    %549 = vmatpush.bf16.msra.mxu0 0
    %550 = vmatpush.bf16.msra.mxu0 0
    %551 = vmatpush.bf16.msra.mxu0 0
    %552 = vmatpush.bf16.msra.mxu0 0
    %553 = vmatpush.bf16.msra.mxu0 0
    %554 = vmatpush.bf16.msra.mxu0 0
    %555 = vmatpush.bf16.msra.mxu0 0
    %556 = vmatpush.bf16.msra.mxu0 %v547
    %557 = vmatmul.bf16.gmra.mxu0 %v544
    %v558 = vpop.f32.mrf.mxu0
    %v559 = vadd.f32 0.0, %v558
    %v560 = vpop.f32.mrf.mxu0
    %v561 = vadd.f32 0.0, %v560
    %562 = vdwg.mxu0
    %v563 = vadd.f32 %v424, %v559
    %v564 = vadd.f32 %v426, %v561
    %565 = vrot.lane.b32.xlu0 %v269, 104
    %v566 = vpop.permute.xlu0 %565
    %567 = vrot.lane.b32.xlu0 %v148, 72
    %v568 = vpop.permute.xlu0 %567
    %v570 = vsel %vm151, %v566, 0
    %v573 = vsel %vm151, %v568, 0
    %575 = vmatpush.bf16.xpose.msra.mxu0 0
    %576 = vmatpush.bf16.xpose.msra.mxu0 0
    %577 = vmatpush.bf16.xpose.msra.mxu0 0
    %578 = vmatpush.bf16.xpose.msra.mxu0 0
    %579 = vmatpush.bf16.xpose.msra.mxu0 0
    %580 = vmatpush.bf16.xpose.msra.mxu0 0
    %581 = vmatpush.bf16.xpose.msra.mxu0 0
    %582 = vmatpush.bf16.xpose.msra.mxu0 %v573
    %583 = vmatmul.bf16.gmra.mxu0 %v570
    %v584 = vpop.f32.mrf.mxu0
    %v585 = vadd.f32 0.0, %v584
    %v586 = vpop.f32.mrf.mxu0
    %587 = vdwg.mxu0
    %588 = vrot.lane.b32.xlu0 %v295, 104
    %v589 = vpop.permute.xlu0 %588
    %590 = vrot.lane.b32.xlu0 %v173, 72
    %v591 = vpop.permute.xlu0 %590
    %v593 = vsel %vm151, %v589, 0
    %v596 = vsel %vm151, %v591, 0
    %598 = vmatpush.bf16.xpose.msra.mxu0 0
    %599 = vmatpush.bf16.xpose.msra.mxu0 0
    %600 = vmatpush.bf16.xpose.msra.mxu0 0
    %601 = vmatpush.bf16.xpose.msra.mxu0 0
    %602 = vmatpush.bf16.xpose.msra.mxu0 0
    %603 = vmatpush.bf16.xpose.msra.mxu0 0
    %604 = vmatpush.bf16.xpose.msra.mxu0 0
    %605 = vmatpush.bf16.xpose.msra.mxu0 %v596
    %606 = vmatmul.bf16.gmra.mxu0 %v593
    %v607 = vpop.f32.mrf.mxu0
    %v608 = vadd.f32 0.0, %v607
    %v609 = vpop.f32.mrf.mxu0
    %610 = vdwg.mxu0
    %v611 = vsel %vm196, %v585, -inf
    %v612 = vsel %vm196, %v608, -inf
    %v613 = vsel %vm151, %v611, -inf
    %614 = vmax.xlane.f32.xlu0 %v613
    %v615 = vpop.xlane.xlu0 %614
    %v616 = vsel %vm151, %v612, -inf
    %617 = vmax.xlane.f32.xlu0 %v616
    %v618 = vpop.xlane.xlu0 %617
    %v619 = vsub.f32 %v611, %v615
    %v620 = vsub.f32 %v612, %v618
    %v621 = vmul.f32 %v619, 1.442695
    %v622 = vpow.pop %v621
    %v623 = vmul.f32 %v620, 1.442695
    %v624 = vpow.pop %v623
    %v625 = vsel %vm151, %v622, 0.0
    %626 = vadd.xlane.f32.xlu0 %v625
    %v627 = vpop.xlane.xlu0 %626
    %v628 = vsel %vm151, %v624, 0.0
    %629 = vadd.xlane.f32.xlu0 %v628
    %v630 = vpop.xlane.xlu0 %629
    %v631 = vrcp.pop %v627
    %v632 = vrcp.pop %v630
    %v633 = vmul.f32 %v622, %v631
    %v634 = vmul.f32 %v624, %v632
    %v635 = vpack.c.bf16 %v633, %v633
    %v636 = vpack.c.bf16 %v634, %v634
    %637 = vrot.lane.b32.xlu0 %v148, 40
    %v638 = vpop.permute.xlu0 %637
    %v640 = vsel %vm151, %v635, 0
    %v643 = vsel %vm228, %v638, 0
    %645 = vmatpush.bf16.msra.mxu0 0
    %646 = vmatpush.bf16.msra.mxu0 0
    %647 = vmatpush.bf16.msra.mxu0 0
    %648 = vmatpush.bf16.msra.mxu0 0
    %649 = vmatpush.bf16.msra.mxu0 0
    %650 = vmatpush.bf16.msra.mxu0 0
    %651 = vmatpush.bf16.msra.mxu0 0
    %652 = vmatpush.bf16.msra.mxu0 %v643
    %653 = vmatmul.bf16.gmra.mxu0 %v640
    %v654 = vpop.f32.mrf.mxu0
    %v655 = vadd.f32 0.0, %v654
    %v656 = vpop.f32.mrf.mxu0
    %657 = vdwg.mxu0
    %658 = vrot.lane.b32.xlu0 %v173, 40
    %v659 = vpop.permute.xlu0 %658
    %v661 = vsel %vm151, %v636, 0
    %v664 = vsel %vm228, %v659, 0
    %666 = vmatpush.bf16.msra.mxu0 0
    %667 = vmatpush.bf16.msra.mxu0 0
    %668 = vmatpush.bf16.msra.mxu0 0
    %669 = vmatpush.bf16.msra.mxu0 0
    %670 = vmatpush.bf16.msra.mxu0 0
    %671 = vmatpush.bf16.msra.mxu0 0
    %672 = vmatpush.bf16.msra.mxu0 0
    %673 = vmatpush.bf16.msra.mxu0 %v664
    %674 = vmatmul.bf16.gmra.mxu0 %v661
    %v675 = vpop.f32.mrf.mxu0
    %v676 = vadd.f32 0.0, %v675
    %v677 = vpop.f32.mrf.mxu0
    %678 = vdwg.mxu0
    %v679 = vpack.c.bf16 %v676, %v655
    %v681 = vsel %vm151, %v679, 0
    %v684 = vsel %vm228, %v145, 0
    %686 = vmatpush.bf16.msra.mxu0 0
    %687 = vmatpush.bf16.msra.mxu0 0
    %688 = vmatpush.bf16.msra.mxu0 0
    %689 = vmatpush.bf16.msra.mxu0 0
    %690 = vmatpush.bf16.msra.mxu0 0
    %691 = vmatpush.bf16.msra.mxu0 0
    %692 = vmatpush.bf16.msra.mxu0 0
    %693 = vmatpush.bf16.msra.mxu0 %v684
    %694 = vmatmul.bf16.gmra.mxu0 %v681
    %v695 = vpop.f32.mrf.mxu0
    %v696 = vadd.f32 0.0, %v695
    %v697 = vpop.f32.mrf.mxu0
    %v698 = vadd.f32 0.0, %v697
    %699 = vdwg.mxu0
    %v700 = vadd.f32 %v563, %v696
    %v701 = vadd.f32 %v564, %v698
    %v702 = vld [vmem:[%s5] sm:$0x1]
    %v704 = vperm.slane %v702, 0
    %v706 = vadd.f32 %v700, %v704
    %v707 = vadd.f32 %v701, %v704
    %v708 = vadd.f32 %v90, %v706
    %v709 = vadd.f32 %v91, %v707
    %v710 = vld [vmem:[%s6] sm:$0x1]
    %v711 = vld [vmem:[%s7] sm:$0x1]
    %v712 = vsel %vm113, %v708, 0.0
    %713 = vadd.xlane.f32.xlu0 %v712
    %v714 = vpop.xlane.xlu0 %713
    %v715 = vsel %vm113, %v709, 0.0
    %716 = vadd.xlane.f32.xlu0 %v715
    %v717 = vpop.xlane.xlu0 %716
    %v718 = vrcp.pop 32.0
    %v719 = vmul.f32 32.0, %v718
    %v720 = vsub.f32 1.0, %v719
    %v721 = vmul.f32 %v718, %v720
    %v722 = vadd.f32 %v718, %v721
    %vm723 = vweird.f32 %v718
    %v724 = vsel %vm723, %v718, %v722
    %v725 = vmul.f32 %v714, %v724
    %v726 = vmul.f32 %v717, %v724
    %v727 = vsub.f32 %v708, %v725
    %v728 = vsub.f32 %v709, %v726
    %v729 = vmul.f32 %v727, %v727
    %v730 = vmul.f32 %v728, %v728
    %v731 = vsel %vm113, %v729, 0.0
    %732 = vadd.xlane.f32.xlu0 %v731
    %v733 = vpop.xlane.xlu0 %732
    %v734 = vsel %vm113, %v730, 0.0
    %735 = vadd.xlane.f32.xlu0 %v734
    %v736 = vpop.xlane.xlu0 %735
    %v737 = vmul.f32 %v733, %v724
    %v738 = vmul.f32 %v736, %v724
    %v739 = vadd.f32 %v737, 1e-05
    %v740 = vadd.f32 %v738, 1e-05
    %v741 = vrsqrt.pop %v739
    %v742 = vmul.f32 %v741, %v739
    %v743 = vmul.f32 %v742, %v741
    %v744 = vmul.f32 0.5, %v743
    %v745 = vsub.f32 1.5, %v744
    %v746 = vmul.f32 %v741, %v745
    %vm747 = vweird.f32 %v739
    %vm748 = vweird.f32 %v741
    %vm749 = vmor %vm747, %vm748
    %v750 = vsel %vm749, %v741, %v746
    %v751 = vrsqrt.pop %v740
    %v752 = vmul.f32 %v751, %v740
    %v753 = vmul.f32 %v752, %v751
    %v754 = vmul.f32 0.5, %v753
    %v755 = vsub.f32 1.5, %v754
    %v756 = vmul.f32 %v751, %v755
    %vm757 = vweird.f32 %v740
    %vm758 = vweird.f32 %v751
    %vm759 = vmor %vm757, %vm758
    %v760 = vsel %vm759, %v751, %v756
    %v761 = vmul.f32 %v727, %v750
    %v762 = vmul.f32 %v728, %v760
    %v764 = vperm.slane %v710, 0
    %v766 = vmul.f32 %v761, %v764
    %v767 = vmul.f32 %v762, %v764
    %v769 = vperm.slane %v711, 0
    %v771 = vadd.f32 %v766, %v769
    %v772 = vadd.f32 %v767, %v769
    %v773 = vpack.c.bf16 %v772, %v771
    %v774 = vld [vmem:[#allocation6] sm:$0xf]
    %v775 = vld [vmem:[#allocation6 + $0x4] sm:$0xf]
    %v776 = vld [vmem:[#allocation6 + $0x8] sm:$0xf]
    %v777 = vld [vmem:[#allocation6 + $0xc] sm:$0xf]
    %v778 = vld [vmem:[%s9] sm:$0x1]
    %v780 = vperm.slane %v778, 0
    %v786 = vunpack.c.l.b16 %v774
    %v787 = vunpack.c.l.b16 %v775
    %v788 = vunpack.c.l.b16 %v776
    %v789 = vunpack.c.l.b16 %v777
    %v790 = vpack.c.b16 %v787, %v786
    %v791 = vpack.c.b16 %v789, %v788
    %v795 = vsel %vm113, %v773, 0
    %797 = vmatpush.bf16.msra.mxu0 0
    %798 = vmatpush.bf16.msra.mxu0 0
    %799 = vmatpush.bf16.msra.mxu0 0
    %800 = vmatpush.bf16.msra.mxu0 0
    %801 = vmatpush.bf16.msra.mxu0 0
    %802 = vmatpush.bf16.msra.mxu0 0
    %803 = vmatpush.bf16.msra.mxu0 %v791
    %804 = vmatpush.bf16.msra.mxu0 %v790
    %805 = vmatmul.bf16.gmra.mxu0 %v795
    %v806 = vpop.f32.mrf.mxu0
    %v807 = vadd.f32 %v780, %v806
    %v808 = vpop.f32.mrf.mxu0
    %v809 = vadd.f32 %v780, %v808
    %810 = vdwg.mxu0
    %v811 = vmax.f32 %v807, 0.0
    %v812 = vmax.f32 %v809, 0.0
    %v813 = vpack.c.bf16 %v812, %v811
    %v814 = vld [vmem:[%s10] sm:$0xf]
    %v815 = vld [vmem:[%s10 + $0x4] sm:$0xf]
    %v816 = vld [vmem:[%s10 + $0x8] sm:$0xf]
    %v817 = vld [vmem:[%s10 + $0xc] sm:$0xf]
    %v818 = vld [vmem:[%s10 + $0x10] sm:$0xf]
    %v819 = vld [vmem:[%s10 + $0x14] sm:$0xf]
    %v820 = vld [vmem:[%s10 + $0x18] sm:$0xf]
    %v821 = vld [vmem:[%s10 + $0x1c] sm:$0xf]
    %v822 = vld [vmem:[%s11] sm:$0x1]
    %v824 = vperm.slane %v822, 0
    %v834 = vunpack.c.l.b16 %v814
    %v835 = vunpack.c.l.b16 %v815
    %v836 = vunpack.c.l.b16 %v816
    %v837 = vunpack.c.l.b16 %v817
    %v838 = vunpack.c.l.b16 %v818
    %v839 = vunpack.c.l.b16 %v819
    %v840 = vunpack.c.l.b16 %v820
    %v841 = vunpack.c.l.b16 %v821
    %v842 = vpack.c.b16 %v835, %v834
    %v843 = vpack.c.b16 %v837, %v836
    %v844 = vpack.c.b16 %v839, %v838
    %v845 = vpack.c.b16 %v841, %v840
    %vm850 = vcmask 523264
    %v852 = vsel %vm850, %v813, 0
    %854 = vmatpush.bf16.msra.mxu0 0
    %855 = vmatpush.bf16.msra.mxu0 0
    %856 = vmatpush.bf16.msra.mxu0 0
    %857 = vmatpush.bf16.msra.mxu0 0
    %858 = vmatpush.bf16.msra.mxu0 %v845
    %859 = vmatpush.bf16.msra.mxu0 %v844
    %860 = vmatpush.bf16.msra.mxu0 %v843
    %861 = vmatpush.bf16.msra.mxu0 %v842
    %862 = vmatmul.bf16.gmra.mxu0 %v852
    %v863 = vpop.f32.mrf.mxu0
    %v864 = vadd.f32 %v824, %v863
    %v865 = vpop.f32.mrf.mxu0
    %v866 = vadd.f32 %v824, %v865
    %867 = vdwg.mxu0
    %v868 = vadd.f32 %v771, %v864
    %v869 = vadd.f32 %v772, %v866
    %v870 = vld [vmem:[%s12] sm:$0x1]
    %v871 = vld [vmem:[%s13] sm:$0x1]
    %v872 = vsel %vm113, %v868, 0.0
    %873 = vadd.xlane.f32.xlu0 %v872
    %v874 = vpop.xlane.xlu0 %873
    %v875 = vsel %vm113, %v869, 0.0
    %876 = vadd.xlane.f32.xlu0 %v875
    %v877 = vpop.xlane.xlu0 %876
    %v878 = vmul.f32 %v874, %v724
    %v879 = vmul.f32 %v877, %v724
    %v880 = vsub.f32 %v868, %v878
    %v881 = vsub.f32 %v869, %v879
    %v882 = vmul.f32 %v880, %v880
    %v883 = vmul.f32 %v881, %v881
    %v884 = vsel %vm113, %v882, 0.0
    %885 = vadd.xlane.f32.xlu0 %v884
    %v886 = vpop.xlane.xlu0 %885
    %v887 = vsel %vm113, %v883, 0.0
    %888 = vadd.xlane.f32.xlu0 %v887
    %v889 = vpop.xlane.xlu0 %888
    %v890 = vmul.f32 %v886, %v724
    %v891 = vmul.f32 %v889, %v724
    %v892 = vadd.f32 %v890, 1e-05
    %v893 = vadd.f32 %v891, 1e-05
    %v894 = vrsqrt.pop %v892
    %v895 = vmul.f32 %v894, %v892
    %v896 = vmul.f32 %v895, %v894
    %v897 = vmul.f32 0.5, %v896
    %v898 = vsub.f32 1.5, %v897
    %v899 = vmul.f32 %v894, %v898
    %vm900 = vweird.f32 %v892
    %vm901 = vweird.f32 %v894
    %vm902 = vmor %vm900, %vm901
    %v903 = vsel %vm902, %v894, %v899
    %v904 = vrsqrt.pop %v893
    %v905 = vmul.f32 %v904, %v893
    %v906 = vmul.f32 %v905, %v904
    %v907 = vmul.f32 0.5, %v906
    %v908 = vsub.f32 1.5, %v907
    %v909 = vmul.f32 %v904, %v908
    %vm910 = vweird.f32 %v893
    %vm911 = vweird.f32 %v904
    %vm912 = vmor %vm910, %vm911
    %v913 = vsel %vm912, %v904, %v909
    %v914 = vmul.f32 %v880, %v903
    %v915 = vmul.f32 %v881, %v913
    %v917 = vperm.slane %v870, 0
    %v919 = vmul.f32 %v914, %v917
    %v920 = vmul.f32 %v915, %v917
    %v922 = vperm.slane %v871, 0
    %v924 = vadd.f32 %v919, %v922
    %v925 = vadd.f32 %v920, %v922
    %v926 = vld [vmem:[%s14] sm:$0x1]
    %v928 = vperm.slane %v926, 0
    %v930 = vmul.f32 %v924, %v928
    %v931 = vmul.f32 %v925, %v928
    %v932 = vsel %vm113, %v930, 0.0
    %933 = vadd.xlane.f32.xlu0 %v932
    %v934 = vpop.xlane.xlu0 %933
    %v935 = vsel %vm113, %v931, 0.0
    %936 = vadd.xlane.f32.xlu0 %v935
    %v937 = vpop.xlane.xlu0 %936
    %v938 = vld [vmem:[#allocation2] sm:$0x1]
    %v940 = vperm.slane %v938, 0
    %v942 = vadd.f32 %v934, %v940
    %v943 = vadd.f32 %v937, %v940
    %946 = vset.pattern.permute.xlu0 0
    %947 = vperm.xlu0 %946, %v942
    %v948 = vpop.permute.xlu0 %947
    %949 = vset.pattern.permute.xlu0 0
    %950 = vperm.xlu0 %949, %v943
    %v951 = vpop.permute.xlu0 %950
    %v952 = vperm.slane %v948, %v140
    %v953 = vperm.slane %v951, %v140
    %vm954 = vcmask 1041409
    %v955 = vsel %vm954, %v953, %v952
    %vm957 = vcmask 58368
    %958 = vst.msk [vmem:[#allocation8] sm:$0x3] %vm957, %v955
    // Predicated region
    $region74: #{tpu_custom_call.1} parent=1 // pred_check
      _
    $region75: #{tpu_custom_call.1} parent=1 // pred_check_branch
      %960 = sbr.rel (0) target = $region77
    $region76: #{tpu_custom_call.1} parent=1 // pred_region
      %962 = vsyncadd [#allocation5], 0
      %s964 = sshll.u32 [#allocation8], 4
      %s965 = int_to_ptr.vmem [resolvable:$true] %s964
      %s966 = sshll.u32 %s16, 4
      %s967 = int_to_ptr.hbm [resolvable:$true] %s966
      %969 = dma.vmem_to_hbm [thread:$0]  %s965, 32, %s967, [#allocation5]
    $region77: #{tpu_custom_call.1} parent=1 // pred_fallthru
      _
    // Predicated region
    $region78: #{tpu_custom_call.1} parent=1 // pred_check
      _
    $region79: #{tpu_custom_call.1} parent=1 // pred_check_branch
      %971 = sbr.rel (0) target = $region81
    $region80: #{tpu_custom_call.1} parent=1 // pred_region
      %973 = dma.done [#allocation5], 32
    $region81: #{tpu_custom_call.1} parent=1 // pred_fallthru
      _
    %974 = vsyncpa [#allocation4], 1
    %975 = vsyncpa [#allocation7], 1
    %976 = vsyncpa [#allocation5], 1

</llo_original>
